<compile_context>
chip_gen: v7x
topology: tpu7x:2x2x1
jax: 0.10.0
libtpu: 0.0.40
codegen_flags: <defaults>
</compile_context>

<pallas_src>
import math
from dataclasses import dataclass
from functools import partial

import numpy as np
import jax
import jax.numpy as jnp
from jax import lax
from jax.experimental import pallas as pl
from jax.experimental.pallas import tpu as pltpu


_VMEM = pl.BlockSpec(memory_space=pltpu.MemorySpace.VMEM)


def _gelu_exact(x):
    # PyTorch nn.GELU() default: exact erf-based GELU.
    return 0.5 * x * (1.0 + lax.erf(x * (1.0 / math.sqrt(2.0))))


def _layernorm(y, eps=1e-5):
    # torch LayerNorm (biased variance); gamma=1 / beta=0 folded out (init values).
    mu = jnp.mean(y, axis=-1, keepdims=True)
    d = y - mu
    var = jnp.mean(d * d, axis=-1, keepdims=True)
    return d * lax.rsqrt(var + eps)


# ----------------------------------------------------------------------------
# The single fused forward kernel
# ----------------------------------------------------------------------------
def _fused_forward_kernel(x_ref, enc_ref, slab_ref, o_ref, *,
                          offs, n_modes, hidden, num_layers, num_outputs,
                          enc_rows):
    f32 = jnp.float32
    bf16 = jnp.bfloat16
    H = hidden

    def w(off, rows):                      # bf16 weight view (static, tile-aligned)
        return slab_ref[off:off + rows, :]

    def brow(off):                         # (1, H) bias row, upcast to f32
        return slab_ref[off:off + 1, :].astype(f32)

    # ---- modal encoders: ONE block-diagonal matmul, then per-mode LN+GELU ---
    x = x_ref[...]                                             # (B, IN_PAD) f32
    enc_w = enc_ref[:enc_rows, :]                              # (IN_PAD, n_modes*H)
    enc_b = enc_ref[enc_rows:enc_rows + 1, :].astype(f32)      # (1, n_modes*H)
    y = jnp.dot(x.astype(bf16), enc_w, preferred_element_type=f32) + enc_b

    feats = []
    for m in range(n_modes):                                   # 128-lane-aligned slices
        ym = y[:, m * H:(m + 1) * H]
        feats.append(_gelu_exact(_layernorm(ym)))
    feat = jnp.concatenate(feats, axis=-1)                     # (B, n_modes*H)

    # ---- fusion Linear -> LayerNorm -> GELU (single K = n_modes*H matmul) ---
    fused_pre = jnp.dot(feat.astype(bf16), w(offs['W_fus'], n_modes * H),
                        preferred_element_type=f32) + brow(offs['fus_b'])
    fused = _gelu_exact(_layernorm(fused_pre))                 # (B, H)

    # ---- adaptive resonance layers: x@WqK -> segmented softmax -> @VWo -----
    seg = w(offs['SEG'], H)                                    # (H, H) constant
    for l in range(num_layers):
        s = jnp.dot(fused.astype(bf16), w(offs['WqK'][l], H),
                    preferred_element_type=f32) + brow(offs['sbias'][l])
        # One per-row max is a valid stabilizer for all head bands; padded
        # score lanes carry -1e9 so their exp is exactly 0.
        s = s - jnp.max(s, axis=-1, keepdims=True)
        p = jnp.exp(s)                                         # (B, H) f32
        denom = jnp.dot(p.astype(bf16), seg, preferred_element_type=f32)
        denom = jnp.maximum(denom, 1e-30)                      # guard 0/0 -> NaN
        p = p * pl.reciprocal(denom, approx=True)
        fused = jnp.dot(p.astype(bf16), w(offs['VWo'][l], H),
                        preferred_element_type=f32) + brow(offs['bo'][l])

    # ---- SOFM winner lookup: argmin_g( -2 x.g + ||g||^2 ) -------------------
    d2 = jnp.dot(fused.astype(bf16), w(offs['m2gT'], H),
                 preferred_element_type=f32) + brow(offs['gsq'])        # (B, H)
    gidx = lax.broadcasted_iota(jnp.int32, d2.shape, 1)
    dmin = jnp.min(d2, axis=-1, keepdims=True)
    cand = jnp.where(d2 <= dmin, gidx, d2.shape[-1])   # first-min (torch tie rule)
    winner = jnp.min(cand, axis=-1, keepdims=True)
    onehot = (gidx == winner).astype(bf16)                              # (B, H)
    mapped = jnp.dot(onehot, w(offs['grid'], H), preferred_element_type=f32)

    # ---- batch mean -> output Linear -> per-element activations ------------
    m_mean = jnp.mean(mapped, axis=0, keepdims=True)                    # (1, H)
    logits = jnp.dot(m_mean.astype(bf16), w(offs['out_wT'], H),
                     preferred_element_type=f32) + brow(offs['out_b'])  # (1, H)
    idx = lax.broadcasted_iota(jnp.int32, logits.shape, 1)
    relu = jnp.maximum(logits, 0.0)
    sig = 1.0 / (1.0 + jnp.exp(-logits))      # exact sigmoid for final outputs
    out = jnp.where(idx == 1, relu, sig)      # index 1 -> relu, others sigmoid
    out = jnp.where(idx < num_outputs, out, 0.0)   # zero the padded lanes
    o_ref[...] = out


# ----------------------------------------------------------------------------
# Model wrapper (deterministic synthetic parameters)
# ----------------------------------------------------------------------------
@dataclass
class ToolConditionMetrics:
    wear_level: float
    remaining_life: float
    failure_probability: float
    quality_impact: float
    confidence_score: float
    anomaly_score: float


def _pad_rows(a, mult=8):
    r = a.shape[0]
    rp = ((r + mult - 1) // mult) * mult
    if rp == r:
        return a
    return np.concatenate([a, np.zeros((rp - r, a.shape[1]), a.dtype)], axis=0)


class AdaptiveResonanceNetworkPallas:
    NUM_HEADS = 4
    MEMORY_SIZE = 16
    MAP_SIZE = (8, 8)
    NUM_RESONANCE_LAYERS = 3
    NUM_OUTPUTS = 6

    def __init__(self, input_dims, hidden_dim=128, seed=0):
        H = hidden_dim
        nh = self.NUM_HEADS
        assert H % nh == 0
        hd = H // nh
        M = self.MEMORY_SIZE
        L = self.NUM_RESONANCE_LAYERS
        S = nh * M
        G = self.MAP_SIZE[0] * self.MAP_SIZE[1]
        assert H % 128 == 0, "lane-aligned slab packing assumes hidden_dim % 128 == 0"
        assert S <= H and G <= H and self.NUM_OUTPUTS <= H

        self.input_dims = dict(input_dims)
        self.modes = list(input_dims.keys())
        self.hidden_dim = H
        n_modes = len(self.modes)
        dims = [self.input_dims[m] for m in self.modes]
        total_in = sum(dims)
        in_pad = ((total_in + 7) // 8) * 8

        key = jax.random.PRNGKey(seed)

        def nrm(k, shape, scale=0.05):
            return np.asarray(scale * jax.random.normal(k, shape), np.float32)

        # ---- modal encoders -> block-diagonal weight + concatenated bias ----
        enc_bd = np.zeros((in_pad, n_modes * H), np.float32)
        enc_b = np.zeros((1, n_modes * H), np.float32)
        off = 0
        for mi, _mode in enumerate(self.modes):
            d = dims[mi]
            key, k1, k2 = jax.random.split(key, 3)
            enc_bd[off:off + d, mi * H:(mi + 1) * H] = nrm(k1, (d, H))
            enc_b[:, mi * H:(mi + 1) * H] = nrm(k2, (1, H))
            off += d
        enc_slab = np.concatenate([enc_bd, _pad_rows(enc_b)], axis=0)

        # ---- fusion Linear(n_modes*H -> H) ----
        key, k1, k2 = jax.random.split(key, 3)
        fusion_wT = nrm(k1, (n_modes * H, H))
        fusion_b = nrm(k2, (1, H))

        # ---- resonance layers: fold Wq / Wo into the constant memory K/V ----
        scale = 1.0 / math.sqrt(hd)
        layer_items = []
        for _ in range(L):
            key, km, kq, kk, kv, ko, kb = jax.random.split(key, 7)
            memory = np.asarray(jax.random.normal(km, (M, H)), np.float32)
            wqT = nrm(kq, (H, H)); wkT = nrm(kk, (H, H)); wvT = nrm(kv, (H, H))
            bq = np.zeros((1, H), np.float32)
            bk = np.zeros((1, H), np.float32)
            bv = np.zeros((1, H), np.float32)
            woT = nrm(ko, (H, H)); bo = nrm(kb, (1, H))
            k_full = memory @ wkT + bk                         # (M, H) constant
            v_full = memory @ wvT + bv                         # (M, H) constant
            WqK = np.zeros((H, H), np.float32)                 # lanes S.. zero
            sbias = np.full((1, H), -1e9, np.float32)          # padded scores -> -inf-ish
            VWo = np.zeros((H, H), np.float32)                 # rows S.. zero
            for h in range(nh):
                hs = slice(h * hd, (h + 1) * hd)
                ms = slice(h * M, (h + 1) * M)
                WqK[:, ms] = scale * (wqT[:, hs] @ k_full[:, hs].T)
                sbias[:, ms] = scale * (bq[:, hs] @ k_full[:, hs].T)
                VWo[ms, :] = v_full[:, hs] @ woT[hs, :]
            layer_items.append((WqK, sbias, VWo, bo))

        # ---- segmented-softmax denominator matrix (constant) ----
        SEG = np.zeros((H, H), np.float32)
        for h in range(nh):
            SEG[h * M:(h + 1) * M, h * M:(h + 1) * M] = 1.0
        if S < H:
            SEG[:S, S:] = 1.0   # padded columns get the full row sum (>0, avoids 0/0)

        # ---- SOFM grid: precompute -2*g^T and ||g||^2 ----
        key, kg = jax.random.split(key)
        grid = np.asarray(jax.random.normal(kg, (G, H)), np.float32)
        m2gT = np.zeros((H, H), np.float32)
        m2gT[:, :G] = -2.0 * grid.T
        gsq = np.full((1, H), 1e9, np.float32)      # padded prototypes never win
        gsq[0, :G] = np.sum(grid * grid, axis=-1)
        grid_pad = np.zeros((H, H), np.float32)
        grid_pad[:G, :] = grid

        # ---- output head (H -> 6), lane padded ----
        key, kw, kb = jax.random.split(key, 3)
        out_wT = np.zeros((H, H), np.float32)
        out_wT[:, :self.NUM_OUTPUTS] = nrm(kw, (H, self.NUM_OUTPUTS))
        out_b = np.zeros((1, H), np.float32)
        out_b[:, :self.NUM_OUTPUTS] = nrm(kb, (1, self.NUM_OUTPUTS))

        # ---- pack everything into ONE 128-lane bf16 slab (8-row aligned) ----
        items = [fusion_wT, fusion_b]
        for (WqK, sbias, VWo, bo) in layer_items:
            items += [WqK, sbias, VWo, bo]
        items += [SEG, m2gT, gsq, grid_pad, out_wT, out_b]

        blocks, row_offs, row = [], [], 0
        for a in items:
            a = _pad_rows(a)
            row_offs.append(row)
            blocks.append(a)
            row += a.shape[0]
        slab = np.concatenate(blocks, axis=0)

        offs = {'W_fus': row_offs[0], 'fus_b': row_offs[1],
                'WqK': [], 'sbias': [], 'VWo': [], 'bo': []}
        i = 2
        for _ in range(L):
            offs['WqK'].append(row_offs[i])
            offs['sbias'].append(row_offs[i + 1])
            offs['VWo'].append(row_offs[i + 2])
            offs['bo'].append(row_offs[i + 3])
            i += 4
        for name in ('SEG', 'm2gT', 'gsq', 'grid', 'out_wT', 'out_b'):
            offs[name] = row_offs[i]
            i += 1

        self._slab = jnp.asarray(slab, jnp.bfloat16)          # single weight slab
        self._enc_slab = jnp.asarray(enc_slab, jnp.bfloat16)  # encoder slab (384 lanes)

        # ---- build the single fused pallas_call + jitted forward ----
        kern = partial(_fused_forward_kernel,
                       offs=offs, n_modes=n_modes, hidden=H, num_layers=L,
                       num_outputs=self.NUM_OUTPUTS, enc_rows=in_pad)
        call = pl.pallas_call(
            kern,
            out_shape=jax.ShapeDtypeStruct((1, H), jnp.float32),
            in_specs=[_VMEM, _VMEM, _VMEM],
            out_specs=_VMEM,
        )
        num_out = self.NUM_OUTPUTS
        pad_cols = in_pad - total_in

        def _fwd(xs, enc_slab_, slab_):
            x_cat = jnp.concatenate(xs, axis=-1)               # (B, total_in)
            if pad_cols:
                x_cat = jnp.pad(x_cat, ((0, 0), (0, pad_cols)))
            out = call(x_cat, enc_slab_, slab_)
            return out[0, :num_out]                            # (6,)

        self._forward = jax.jit(_fwd)

    def __call__(self, inputs):
        xs = []
        for mode in self.modes:
            x = jnp.asarray(inputs[mode], jnp.float32)
            if x.ndim == 1:
                x = x[None, :]
            xs.append(x)
        vals = self._forward(tuple(xs), self._enc_slab, self._slab)
        vals = np.asarray(jax.block_until_ready(vals))         # single D2H transfer
        return ToolConditionMetrics(
            wear_level=float(vals[0]),
            remaining_life=float(vals[1]),
            failure_probability=float(vals[2]),
            quality_impact=float(vals[3]),
            confidence_score=float(vals[4]),
            anomaly_score=float(vals[5]),
        )


# ----------------------------------------------------------------------------
if __name__ == "__main__":
    input_dims = {"vibration": 16, "temperature": 8, "acoustic": 12}
    batch = 2
    hidden_dim = 128

    model = AdaptiveResonanceNetworkPallas(input_dims, hidden_dim=hidden_dim, seed=0)

    key = jax.random.PRNGKey(0)
    inputs = {}
    for mode, dim in input_dims.items():
        key, sub = jax.random.split(key)
        inputs[mode] = jax.random.normal(sub, (batch, dim), dtype=jnp.float32)

    metrics = model(inputs)
    # sanity: sigmoid outputs in (0,1), relu output >= 0
    assert 0.0 < metrics.wear_level < 1.0
    assert metrics.remaining_life >= 0.0
    assert 0.0 < metrics.failure_probability < 1.0
    print("KERNEL_OK")
</pallas_src>

<mosaic_0001>
module attributes {stable_mosaic.version = 11 : i64} {
  func.func @_fused_forward_kernel(%arg0: memref<2x40xf32, #tpu.memory_space<vmem>>, %arg1: memref<48x384xbf16, #tpu.memory_space<vmem>>, %arg2: memref<1736x128xbf16, #tpu.memory_space<vmem>>, %arg3: memref<1x128xf32, #tpu.memory_space<vmem>>) attributes {dimension_semantics = [], scalar_prefetch = 0 : i64, scratch_operands = 0 : i64, tpu.core_type = #tpu.core_type<tc>} {
    %c0 = arith.constant 0 : index
    %c0_0 = arith.constant 0 : index
    %0 = vector.load %arg0[%c0, %c0_0] : memref<2x40xf32, #tpu.memory_space<vmem>>, vector<2x40xf32>
    %c0_1 = arith.constant 0 : index
    %c0_2 = arith.constant 0 : index
    %1 = vector.load %arg1[%c0_1, %c0_2] : memref<48x384xbf16, #tpu.memory_space<vmem>>, vector<40x384xbf16>
    %c40 = arith.constant 40 : index
    %c0_3 = arith.constant 0 : index
    %2 = vector.load %arg1[%c40, %c0_3] : memref<48x384xbf16, #tpu.memory_space<vmem>>, vector<1x384xbf16>
    %3 = arith.extf %2 : vector<1x384xbf16> to vector<1x384xf32>
    %4 = arith.truncf %0 : vector<2x40xf32> to vector<2x40xbf16>
    %cst = arith.constant dense<0.000000e+00> : vector<2x384xf32>
    %5 = tpu.matmul %4, %1, %cst {dimension_numbers = #tpu.dot_dimension_numbers<[1], [0], [0], [1], [0, 0, 1, 1], [], []>} : vector<2x40xbf16>, vector<40x384xbf16>, vector<2x384xf32> -> vector<2x384xf32>
    %6 = vector.broadcast %3 : vector<1x384xf32> to vector<2x384xf32>
    %7 = arith.addf %5, %6 : vector<2x384xf32>
    %8 = vector.extract_strided_slice %7 {offsets = [0, 0], sizes = [2, 128], strides = [1, 1]} : vector<2x384xf32> to vector<2x128xf32>
    %cst_4 = arith.constant dense<0.000000e+00> : vector<2xf32>
    %9 = vector.multi_reduction <add>, %8, %cst_4 [1] : vector<2x128xf32> to vector<2xf32>
    %10 = vector.shape_cast %9 : vector<2xf32> to vector<2x1xf32>
    %cst_5 = arith.constant 1.280000e+02 : f32
    %11 = vector.broadcast %cst_5 : f32 to vector<2x1xf32>
    %12 = arith.divf %10, %11 : vector<2x1xf32>
    %13 = vector.broadcast %12 : vector<2x1xf32> to vector<2x128xf32>
    %14 = arith.subf %8, %13 : vector<2x128xf32>
    %15 = arith.mulf %14, %14 : vector<2x128xf32>
    %cst_6 = arith.constant dense<0.000000e+00> : vector<2xf32>
    %16 = vector.multi_reduction <add>, %15, %cst_6 [1] : vector<2x128xf32> to vector<2xf32>
    %17 = vector.shape_cast %16 : vector<2xf32> to vector<2x1xf32>
    %cst_7 = arith.constant 1.280000e+02 : f32
    %18 = vector.broadcast %cst_7 : f32 to vector<2x1xf32>
    %19 = arith.divf %17, %18 : vector<2x1xf32>
    %cst_8 = arith.constant 9.99999974E-6 : f32
    %20 = vector.broadcast %cst_8 : f32 to vector<2x1xf32>
    %21 = arith.addf %19, %20 : vector<2x1xf32>
    %22 = math.rsqrt %21 : vector<2x1xf32>
    %23 = vector.broadcast %22 : vector<2x1xf32> to vector<2x128xf32>
    %24 = arith.mulf %14, %23 : vector<2x128xf32>
    %cst_9 = arith.constant 5.000000e-01 : f32
    %25 = vector.broadcast %cst_9 : f32 to vector<2x128xf32>
    %26 = arith.mulf %25, %24 : vector<2x128xf32>
    %cst_10 = arith.constant 0.707106769 : f32
    %27 = vector.broadcast %cst_10 : f32 to vector<2x128xf32>
    %28 = arith.mulf %24, %27 : vector<2x128xf32>
    %29 = math.erf %28 : vector<2x128xf32>
    %cst_11 = arith.constant 1.000000e+00 : f32
    %30 = vector.broadcast %cst_11 : f32 to vector<2x128xf32>
    %31 = arith.addf %30, %29 : vector<2x128xf32>
    %32 = arith.mulf %26, %31 : vector<2x128xf32>
    %33 = vector.extract_strided_slice %7 {offsets = [0, 128], sizes = [2, 128], strides = [1, 1]} : vector<2x384xf32> to vector<2x128xf32>
    %cst_12 = arith.constant dense<0.000000e+00> : vector<2xf32>
    %34 = vector.multi_reduction <add>, %33, %cst_12 [1] : vector<2x128xf32> to vector<2xf32>
    %35 = vector.shape_cast %34 : vector<2xf32> to vector<2x1xf32>
    %cst_13 = arith.constant 1.280000e+02 : f32
    %36 = vector.broadcast %cst_13 : f32 to vector<2x1xf32>
    %37 = arith.divf %35, %36 : vector<2x1xf32>
    %38 = vector.broadcast %37 : vector<2x1xf32> to vector<2x128xf32>
    %39 = arith.subf %33, %38 : vector<2x128xf32>
    %40 = arith.mulf %39, %39 : vector<2x128xf32>
    %cst_14 = arith.constant dense<0.000000e+00> : vector<2xf32>
    %41 = vector.multi_reduction <add>, %40, %cst_14 [1] : vector<2x128xf32> to vector<2xf32>
    %42 = vector.shape_cast %41 : vector<2xf32> to vector<2x1xf32>
    %cst_15 = arith.constant 1.280000e+02 : f32
    %43 = vector.broadcast %cst_15 : f32 to vector<2x1xf32>
    %44 = arith.divf %42, %43 : vector<2x1xf32>
    %cst_16 = arith.constant 9.99999974E-6 : f32
    %45 = vector.broadcast %cst_16 : f32 to vector<2x1xf32>
    %46 = arith.addf %44, %45 : vector<2x1xf32>
    %47 = math.rsqrt %46 : vector<2x1xf32>
    %48 = vector.broadcast %47 : vector<2x1xf32> to vector<2x128xf32>
    %49 = arith.mulf %39, %48 : vector<2x128xf32>
    %cst_17 = arith.constant 5.000000e-01 : f32
    %50 = vector.broadcast %cst_17 : f32 to vector<2x128xf32>
    %51 = arith.mulf %50, %49 : vector<2x128xf32>
    %cst_18 = arith.constant 0.707106769 : f32
    %52 = vector.broadcast %cst_18 : f32 to vector<2x128xf32>
    %53 = arith.mulf %49, %52 : vector<2x128xf32>
    %54 = math.erf %53 : vector<2x128xf32>
    %cst_19 = arith.constant 1.000000e+00 : f32
    %55 = vector.broadcast %cst_19 : f32 to vector<2x128xf32>
    %56 = arith.addf %55, %54 : vector<2x128xf32>
    %57 = arith.mulf %51, %56 : vector<2x128xf32>
    %58 = vector.extract_strided_slice %7 {offsets = [0, 256], sizes = [2, 128], strides = [1, 1]} : vector<2x384xf32> to vector<2x128xf32>
    %cst_20 = arith.constant dense<0.000000e+00> : vector<2xf32>
    %59 = vector.multi_reduction <add>, %58, %cst_20 [1] : vector<2x128xf32> to vector<2xf32>
    %60 = vector.shape_cast %59 : vector<2xf32> to vector<2x1xf32>
    %cst_21 = arith.constant 1.280000e+02 : f32
    %61 = vector.broadcast %cst_21 : f32 to vector<2x1xf32>
    %62 = arith.divf %60, %61 : vector<2x1xf32>
    %63 = vector.broadcast %62 : vector<2x1xf32> to vector<2x128xf32>
    %64 = arith.subf %58, %63 : vector<2x128xf32>
    %65 = arith.mulf %64, %64 : vector<2x128xf32>
    %cst_22 = arith.constant dense<0.000000e+00> : vector<2xf32>
    %66 = vector.multi_reduction <add>, %65, %cst_22 [1] : vector<2x128xf32> to vector<2xf32>
    %67 = vector.shape_cast %66 : vector<2xf32> to vector<2x1xf32>
    %cst_23 = arith.constant 1.280000e+02 : f32
    %68 = vector.broadcast %cst_23 : f32 to vector<2x1xf32>
    %69 = arith.divf %67, %68 : vector<2x1xf32>
    %cst_24 = arith.constant 9.99999974E-6 : f32
    %70 = vector.broadcast %cst_24 : f32 to vector<2x1xf32>
    %71 = arith.addf %69, %70 : vector<2x1xf32>
    %72 = math.rsqrt %71 : vector<2x1xf32>
    %73 = vector.broadcast %72 : vector<2x1xf32> to vector<2x128xf32>
    %74 = arith.mulf %64, %73 : vector<2x128xf32>
    %cst_25 = arith.constant 5.000000e-01 : f32
    %75 = vector.broadcast %cst_25 : f32 to vector<2x128xf32>
    %76 = arith.mulf %75, %74 : vector<2x128xf32>
    %cst_26 = arith.constant 0.707106769 : f32
    %77 = vector.broadcast %cst_26 : f32 to vector<2x128xf32>
    %78 = arith.mulf %74, %77 : vector<2x128xf32>
    %79 = math.erf %78 : vector<2x128xf32>
    %cst_27 = arith.constant 1.000000e+00 : f32
    %80 = vector.broadcast %cst_27 : f32 to vector<2x128xf32>
    %81 = arith.addf %80, %79 : vector<2x128xf32>
    %82 = arith.mulf %76, %81 : vector<2x128xf32>
    %83 = tpu.concatenate %32, %57, %82 in 1 : vector<2x128xf32>, vector<2x128xf32>, vector<2x128xf32> -> vector<2x384xf32>
    %84 = arith.truncf %83 : vector<2x384xf32> to vector<2x384xbf16>
    %c0_28 = arith.constant 0 : index
    %c0_29 = arith.constant 0 : index
    %85 = vector.load %arg2[%c0_28, %c0_29] : memref<1736x128xbf16, #tpu.memory_space<vmem>>, vector<384x128xbf16>
    %cst_30 = arith.constant dense<0.000000e+00> : vector<2x128xf32>
    %86 = tpu.matmul %84, %85, %cst_30 {dimension_numbers = #tpu.dot_dimension_numbers<[1], [0], [0], [1], [0, 0, 1, 1], [], []>} : vector<2x384xbf16>, vector<384x128xbf16>, vector<2x128xf32> -> vector<2x128xf32>
    %c384 = arith.constant 384 : index
    %c0_31 = arith.constant 0 : index
    %87 = vector.load %arg2[%c384, %c0_31] : memref<1736x128xbf16, #tpu.memory_space<vmem>>, vector<1x128xbf16>
    %88 = arith.extf %87 : vector<1x128xbf16> to vector<1x128xf32>
    %89 = vector.broadcast %88 : vector<1x128xf32> to vector<2x128xf32>
    %90 = arith.addf %86, %89 : vector<2x128xf32>
    %cst_32 = arith.constant dense<0.000000e+00> : vector<2xf32>
    %91 = vector.multi_reduction <add>, %90, %cst_32 [1] : vector<2x128xf32> to vector<2xf32>
    %92 = vector.shape_cast %91 : vector<2xf32> to vector<2x1xf32>
    %cst_33 = arith.constant 1.280000e+02 : f32
    %93 = vector.broadcast %cst_33 : f32 to vector<2x1xf32>
    %94 = arith.divf %92, %93 : vector<2x1xf32>
    %95 = vector.broadcast %94 : vector<2x1xf32> to vector<2x128xf32>
    %96 = arith.subf %90, %95 : vector<2x128xf32>
    %97 = arith.mulf %96, %96 : vector<2x128xf32>
    %cst_34 = arith.constant dense<0.000000e+00> : vector<2xf32>
    %98 = vector.multi_reduction <add>, %97, %cst_34 [1] : vector<2x128xf32> to vector<2xf32>
    %99 = vector.shape_cast %98 : vector<2xf32> to vector<2x1xf32>
    %cst_35 = arith.constant 1.280000e+02 : f32
    %100 = vector.broadcast %cst_35 : f32 to vector<2x1xf32>
    %101 = arith.divf %99, %100 : vector<2x1xf32>
    %cst_36 = arith.constant 9.99999974E-6 : f32
    %102 = vector.broadcast %cst_36 : f32 to vector<2x1xf32>
    %103 = arith.addf %101, %102 : vector<2x1xf32>
    %104 = math.rsqrt %103 : vector<2x1xf32>
    %105 = vector.broadcast %104 : vector<2x1xf32> to vector<2x128xf32>
    %106 = arith.mulf %96, %105 : vector<2x128xf32>
    %cst_37 = arith.constant 5.000000e-01 : f32
    %107 = vector.broadcast %cst_37 : f32 to vector<2x128xf32>
    %108 = arith.mulf %107, %106 : vector<2x128xf32>
    %cst_38 = arith.constant 0.707106769 : f32
    %109 = vector.broadcast %cst_38 : f32 to vector<2x128xf32>
    %110 = arith.mulf %106, %109 : vector<2x128xf32>
    %111 = math.erf %110 : vector<2x128xf32>
    %cst_39 = arith.constant 1.000000e+00 : f32
    %112 = vector.broadcast %cst_39 : f32 to vector<2x128xf32>
    %113 = arith.addf %112, %111 : vector<2x128xf32>
    %114 = arith.mulf %108, %113 : vector<2x128xf32>
    %c1208 = arith.constant 1208 : index
    %c0_40 = arith.constant 0 : index
    %115 = vector.load %arg2[%c1208, %c0_40] : memref<1736x128xbf16, #tpu.memory_space<vmem>>, vector<128x128xbf16>
    %116 = arith.truncf %114 : vector<2x128xf32> to vector<2x128xbf16>
    %c392 = arith.constant 392 : index
    %c0_41 = arith.constant 0 : index
    %117 = vector.load %arg2[%c392, %c0_41] : memref<1736x128xbf16, #tpu.memory_space<vmem>>, vector<128x128xbf16>
    %cst_42 = arith.constant dense<0.000000e+00> : vector<2x128xf32>
    %118 = tpu.matmul %116, %117, %cst_42 {dimension_numbers = #tpu.dot_dimension_numbers<[1], [0], [0], [1], [0, 0, 1, 1], [], []>} : vector<2x128xbf16>, vector<128x128xbf16>, vector<2x128xf32> -> vector<2x128xf32>
    %c520 = arith.constant 520 : index
    %c0_43 = arith.constant 0 : index
    %119 = vector.load %arg2[%c520, %c0_43] : memref<1736x128xbf16, #tpu.memory_space<vmem>>, vector<1x128xbf16>
    %120 = arith.extf %119 : vector<1x128xbf16> to vector<1x128xf32>
    %121 = vector.broadcast %120 : vector<1x128xf32> to vector<2x128xf32>
    %122 = arith.addf %118, %121 : vector<2x128xf32>
    %cst_44 = arith.constant dense<0xFF800000> : vector<2xf32>
    %123 = vector.multi_reduction <maximumf>, %122, %cst_44 [1] : vector<2x128xf32> to vector<2xf32>
    %124 = vector.shape_cast %123 : vector<2xf32> to vector<2x1xf32>
    %125 = vector.broadcast %124 : vector<2x1xf32> to vector<2x128xf32>
    %126 = arith.subf %122, %125 : vector<2x128xf32>
    %127 = math.exp %126 : vector<2x128xf32>
    %128 = arith.truncf %127 : vector<2x128xf32> to vector<2x128xbf16>
    %cst_45 = arith.constant dense<0.000000e+00> : vector<2x128xf32>
    %129 = tpu.matmul %128, %115, %cst_45 {dimension_numbers = #tpu.dot_dimension_numbers<[1], [0], [0], [1], [0, 0, 1, 1], [], []>} : vector<2x128xbf16>, vector<128x128xbf16>, vector<2x128xf32> -> vector<2x128xf32>
    %cst_46 = arith.constant 1.000000e-30 : f32
    %130 = vector.broadcast %cst_46 : f32 to vector<2x128xf32>
    %131 = arith.maximumf %129, %130 : vector<2x128xf32>
    %132 = tpu.reciprocal %131 {approx = true} : vector<2x128xf32> -> vector<2x128xf32>
    %133 = arith.mulf %127, %132 : vector<2x128xf32>
    %134 = arith.truncf %133 : vector<2x128xf32> to vector<2x128xbf16>
    %c528 = arith.constant 528 : index
    %c0_47 = arith.constant 0 : index
    %135 = vector.load %arg2[%c528, %c0_47] : memref<1736x128xbf16, #tpu.memory_space<vmem>>, vector<128x128xbf16>
    %cst_48 = arith.constant dense<0.000000e+00> : vector<2x128xf32>
    %136 = tpu.matmul %134, %135, %cst_48 {dimension_numbers = #tpu.dot_dimension_numbers<[1], [0], [0], [1], [0, 0, 1, 1], [], []>} : vector<2x128xbf16>, vector<128x128xbf16>, vector<2x128xf32> -> vector<2x128xf32>
    %c656 = arith.constant 656 : index
    %c0_49 = arith.constant 0 : index
    %137 = vector.load %arg2[%c656, %c0_49] : memref<1736x128xbf16, #tpu.memory_space<vmem>>, vector<1x128xbf16>
    %138 = arith.extf %137 : vector<1x128xbf16> to vector<1x128xf32>
    %139 = vector.broadcast %138 : vector<1x128xf32> to vector<2x128xf32>
    %140 = arith.addf %136, %139 : vector<2x128xf32>
    %141 = arith.truncf %140 : vector<2x128xf32> to vector<2x128xbf16>
    %c664 = arith.constant 664 : index
    %c0_50 = arith.constant 0 : index
    %142 = vector.load %arg2[%c664, %c0_50] : memref<1736x128xbf16, #tpu.memory_space<vmem>>, vector<128x128xbf16>
    %cst_51 = arith.constant dense<0.000000e+00> : vector<2x128xf32>
    %143 = tpu.matmul %141, %142, %cst_51 {dimension_numbers = #tpu.dot_dimension_numbers<[1], [0], [0], [1], [0, 0, 1, 1], [], []>} : vector<2x128xbf16>, vector<128x128xbf16>, vector<2x128xf32> -> vector<2x128xf32>
    %c792 = arith.constant 792 : index
    %c0_52 = arith.constant 0 : index
    %144 = vector.load %arg2[%c792, %c0_52] : memref<1736x128xbf16, #tpu.memory_space<vmem>>, vector<1x128xbf16>
    %145 = arith.extf %144 : vector<1x128xbf16> to vector<1x128xf32>
    %146 = vector.broadcast %145 : vector<1x128xf32> to vector<2x128xf32>
    %147 = arith.addf %143, %146 : vector<2x128xf32>
    %cst_53 = arith.constant dense<0xFF800000> : vector<2xf32>
    %148 = vector.multi_reduction <maximumf>, %147, %cst_53 [1] : vector<2x128xf32> to vector<2xf32>
    %149 = vector.shape_cast %148 : vector<2xf32> to vector<2x1xf32>
    %150 = vector.broadcast %149 : vector<2x1xf32> to vector<2x128xf32>
    %151 = arith.subf %147, %150 : vector<2x128xf32>
    %152 = math.exp %151 : vector<2x128xf32>
    %153 = arith.truncf %152 : vector<2x128xf32> to vector<2x128xbf16>
    %cst_54 = arith.constant dense<0.000000e+00> : vector<2x128xf32>
    %154 = tpu.matmul %153, %115, %cst_54 {dimension_numbers = #tpu.dot_dimension_numbers<[1], [0], [0], [1], [0, 0, 1, 1], [], []>} : vector<2x128xbf16>, vector<128x128xbf16>, vector<2x128xf32> -> vector<2x128xf32>
    %cst_55 = arith.constant 1.000000e-30 : f32
    %155 = vector.broadcast %cst_55 : f32 to vector<2x128xf32>
    %156 = arith.maximumf %154, %155 : vector<2x128xf32>
    %157 = tpu.reciprocal %156 {approx = true} : vector<2x128xf32> -> vector<2x128xf32>
    %158 = arith.mulf %152, %157 : vector<2x128xf32>
    %159 = arith.truncf %158 : vector<2x128xf32> to vector<2x128xbf16>
    %c800 = arith.constant 800 : index
    %c0_56 = arith.constant 0 : index
    %160 = vector.load %arg2[%c800, %c0_56] : memref<1736x128xbf16, #tpu.memory_space<vmem>>, vector<128x128xbf16>
    %cst_57 = arith.constant dense<0.000000e+00> : vector<2x128xf32>
    %161 = tpu.matmul %159, %160, %cst_57 {dimension_numbers = #tpu.dot_dimension_numbers<[1], [0], [0], [1], [0, 0, 1, 1], [], []>} : vector<2x128xbf16>, vector<128x128xbf16>, vector<2x128xf32> -> vector<2x128xf32>
    %c928 = arith.constant 928 : index
    %c0_58 = arith.constant 0 : index
    %162 = vector.load %arg2[%c928, %c0_58] : memref<1736x128xbf16, #tpu.memory_space<vmem>>, vector<1x128xbf16>
    %163 = arith.extf %162 : vector<1x128xbf16> to vector<1x128xf32>
    %164 = vector.broadcast %163 : vector<1x128xf32> to vector<2x128xf32>
    %165 = arith.addf %161, %164 : vector<2x128xf32>
    %166 = arith.truncf %165 : vector<2x128xf32> to vector<2x128xbf16>
    %c936 = arith.constant 936 : index
    %c0_59 = arith.constant 0 : index
    %167 = vector.load %arg2[%c936, %c0_59] : memref<1736x128xbf16, #tpu.memory_space<vmem>>, vector<128x128xbf16>
    %cst_60 = arith.constant dense<0.000000e+00> : vector<2x128xf32>
    %168 = tpu.matmul %166, %167, %cst_60 {dimension_numbers = #tpu.dot_dimension_numbers<[1], [0], [0], [1], [0, 0, 1, 1], [], []>} : vector<2x128xbf16>, vector<128x128xbf16>, vector<2x128xf32> -> vector<2x128xf32>
    %c1064 = arith.constant 1064 : index
    %c0_61 = arith.constant 0 : index
    %169 = vector.load %arg2[%c1064, %c0_61] : memref<1736x128xbf16, #tpu.memory_space<vmem>>, vector<1x128xbf16>
    %170 = arith.extf %169 : vector<1x128xbf16> to vector<1x128xf32>
    %171 = vector.broadcast %170 : vector<1x128xf32> to vector<2x128xf32>
    %172 = arith.addf %168, %171 : vector<2x128xf32>
    %cst_62 = arith.constant dense<0xFF800000> : vector<2xf32>
    %173 = vector.multi_reduction <maximumf>, %172, %cst_62 [1] : vector<2x128xf32> to vector<2xf32>
    %174 = vector.shape_cast %173 : vector<2xf32> to vector<2x1xf32>
    %175 = vector.broadcast %174 : vector<2x1xf32> to vector<2x128xf32>
    %176 = arith.subf %172, %175 : vector<2x128xf32>
    %177 = math.exp %176 : vector<2x128xf32>
    %178 = arith.truncf %177 : vector<2x128xf32> to vector<2x128xbf16>
    %cst_63 = arith.constant dense<0.000000e+00> : vector<2x128xf32>
    %179 = tpu.matmul %178, %115, %cst_63 {dimension_numbers = #tpu.dot_dimension_numbers<[1], [0], [0], [1], [0, 0, 1, 1], [], []>} : vector<2x128xbf16>, vector<128x128xbf16>, vector<2x128xf32> -> vector<2x128xf32>
    %cst_64 = arith.constant 1.000000e-30 : f32
    %180 = vector.broadcast %cst_64 : f32 to vector<2x128xf32>
    %181 = arith.maximumf %179, %180 : vector<2x128xf32>
    %182 = tpu.reciprocal %181 {approx = true} : vector<2x128xf32> -> vector<2x128xf32>
    %183 = arith.mulf %177, %182 : vector<2x128xf32>
    %184 = arith.truncf %183 : vector<2x128xf32> to vector<2x128xbf16>
    %c1072 = arith.constant 1072 : index
    %c0_65 = arith.constant 0 : index
    %185 = vector.load %arg2[%c1072, %c0_65] : memref<1736x128xbf16, #tpu.memory_space<vmem>>, vector<128x128xbf16>
    %cst_66 = arith.constant dense<0.000000e+00> : vector<2x128xf32>
    %186 = tpu.matmul %184, %185, %cst_66 {dimension_numbers = #tpu.dot_dimension_numbers<[1], [0], [0], [1], [0, 0, 1, 1], [], []>} : vector<2x128xbf16>, vector<128x128xbf16>, vector<2x128xf32> -> vector<2x128xf32>
    %c1200 = arith.constant 1200 : index
    %c0_67 = arith.constant 0 : index
    %187 = vector.load %arg2[%c1200, %c0_67] : memref<1736x128xbf16, #tpu.memory_space<vmem>>, vector<1x128xbf16>
    %188 = arith.extf %187 : vector<1x128xbf16> to vector<1x128xf32>
    %189 = vector.broadcast %188 : vector<1x128xf32> to vector<2x128xf32>
    %190 = arith.addf %186, %189 : vector<2x128xf32>
    %191 = arith.truncf %190 : vector<2x128xf32> to vector<2x128xbf16>
    %c1336 = arith.constant 1336 : index
    %c0_68 = arith.constant 0 : index
    %192 = vector.load %arg2[%c1336, %c0_68] : memref<1736x128xbf16, #tpu.memory_space<vmem>>, vector<128x128xbf16>
    %cst_69 = arith.constant dense<0.000000e+00> : vector<2x128xf32>
    %193 = tpu.matmul %191, %192, %cst_69 {dimension_numbers = #tpu.dot_dimension_numbers<[1], [0], [0], [1], [0, 0, 1, 1], [], []>} : vector<2x128xbf16>, vector<128x128xbf16>, vector<2x128xf32> -> vector<2x128xf32>
    %c1464 = arith.constant 1464 : index
    %c0_70 = arith.constant 0 : index
    %194 = vector.load %arg2[%c1464, %c0_70] : memref<1736x128xbf16, #tpu.memory_space<vmem>>, vector<1x128xbf16>
    %195 = arith.extf %194 : vector<1x128xbf16> to vector<1x128xf32>
    %196 = vector.broadcast %195 : vector<1x128xf32> to vector<2x128xf32>
    %197 = arith.addf %193, %196 : vector<2x128xf32>
    %198 = tpu.iota {dimensions = array<i32: 1>} : vector<2x128xi32>
    %cst_71 = arith.constant dense<0x7F800000> : vector<2xf32>
    %199 = vector.multi_reduction <minimumf>, %197, %cst_71 [1] : vector<2x128xf32> to vector<2xf32>
    %200 = vector.shape_cast %199 : vector<2xf32> to vector<2x1xf32>
    %201 = vector.broadcast %200 : vector<2x1xf32> to vector<2x128xf32>
    %202 = arith.cmpf ole, %197, %201 : vector<2x128xf32>
    %c128_i32 = arith.constant 128 : i32
    %203 = vector.broadcast %c128_i32 : i32 to vector<2x128xi32>
    %204 = arith.select %202, %198, %203 : vector<2x128xi1>, vector<2x128xi32>
    %cst_72 = arith.constant dense<2147483647> : vector<2xi32>
    %205 = vector.multi_reduction <minsi>, %204, %cst_72 [1] : vector<2x128xi32> to vector<2xi32>
    %206 = vector.shape_cast %205 : vector<2xi32> to vector<2x1xi32>
    %207 = vector.broadcast %206 : vector<2x1xi32> to vector<2x128xi32>
    %208 = arith.cmpi eq, %198, %207 : vector<2x128xi32>
    %209 = arith.extui %208 : vector<2x128xi1> to vector<2x128xi32>
    %210 = arith.sitofp %209 : vector<2x128xi32> to vector<2x128xf32>
    %211 = arith.truncf %210 : vector<2x128xf32> to vector<2x128xbf16>
    %c1472 = arith.constant 1472 : index
    %c0_73 = arith.constant 0 : index
    %212 = vector.load %arg2[%c1472, %c0_73] : memref<1736x128xbf16, #tpu.memory_space<vmem>>, vector<128x128xbf16>
    %cst_74 = arith.constant dense<0.000000e+00> : vector<2x128xf32>
    %213 = tpu.matmul %211, %212, %cst_74 {dimension_numbers = #tpu.dot_dimension_numbers<[1], [0], [0], [1], [0, 0, 1, 1], [], []>} : vector<2x128xbf16>, vector<128x128xbf16>, vector<2x128xf32> -> vector<2x128xf32>
    %cst_75 = arith.constant dense<0.000000e+00> : vector<128xf32>
    %214 = vector.multi_reduction <add>, %213, %cst_75 [0] : vector<2x128xf32> to vector<128xf32>
    %215 = vector.shape_cast %214 : vector<128xf32> to vector<1x128xf32>
    %cst_76 = arith.constant 2.000000e+00 : f32
    %216 = vector.broadcast %cst_76 : f32 to vector<1x128xf32>
    %217 = arith.divf %215, %216 : vector<1x128xf32>
    %218 = arith.truncf %217 : vector<1x128xf32> to vector<1x128xbf16>
    %c1600 = arith.constant 1600 : index
    %c0_77 = arith.constant 0 : index
    %219 = vector.load %arg2[%c1600, %c0_77] : memref<1736x128xbf16, #tpu.memory_space<vmem>>, vector<128x128xbf16>
    %cst_78 = arith.constant dense<0.000000e+00> : vector<1x128xf32>
    %220 = tpu.matmul %218, %219, %cst_78 {dimension_numbers = #tpu.dot_dimension_numbers<[1], [0], [0], [1], [0, 0, 1, 1], [], []>} : vector<1x128xbf16>, vector<128x128xbf16>, vector<1x128xf32> -> vector<1x128xf32>
    %c1728 = arith.constant 1728 : index
    %c0_79 = arith.constant 0 : index
    %221 = vector.load %arg2[%c1728, %c0_79] : memref<1736x128xbf16, #tpu.memory_space<vmem>>, vector<1x128xbf16>
    %222 = arith.extf %221 : vector<1x128xbf16> to vector<1x128xf32>
    %223 = arith.addf %220, %222 : vector<1x128xf32>
    %224 = tpu.iota {dimensions = array<i32: 1>} : vector<1x128xi32>
    %cst_80 = arith.constant 0.000000e+00 : f32
    %225 = vector.broadcast %cst_80 : f32 to vector<1x128xf32>
    %226 = arith.maximumf %223, %225 : vector<1x128xf32>
    %cst_81 = arith.constant 0.000000e+00 : f32
    %227 = vector.broadcast %cst_81 : f32 to vector<1x128xf32>
    %228 = arith.subf %227, %223 : vector<1x128xf32>
    %229 = math.exp %228 : vector<1x128xf32>
    %cst_82 = arith.constant 1.000000e+00 : f32
    %230 = vector.broadcast %cst_82 : f32 to vector<1x128xf32>
    %231 = arith.addf %230, %229 : vector<1x128xf32>
    %cst_83 = arith.constant 1.000000e+00 : f32
    %232 = vector.broadcast %cst_83 : f32 to vector<1x128xf32>
    %233 = arith.divf %232, %231 : vector<1x128xf32>
    %c1_i32 = arith.constant 1 : i32
    %234 = vector.broadcast %c1_i32 : i32 to vector<1x128xi32>
    %235 = arith.cmpi eq, %224, %234 : vector<1x128xi32>
    %236 = arith.select %235, %226, %233 : vector<1x128xi1>, vector<1x128xf32>
    %c6_i32 = arith.constant 6 : i32
    %237 = vector.broadcast %c6_i32 : i32 to vector<1x128xi32>
    %238 = arith.cmpi slt, %224, %237 : vector<1x128xi32>
    %cst_84 = arith.constant 0.000000e+00 : f32
    %239 = vector.broadcast %cst_84 : f32 to vector<1x128xf32>
    %240 = arith.select %238, %236, %239 : vector<1x128xi1>, vector<1x128xf32>
    %c0_85 = arith.constant 0 : index
    %c0_86 = arith.constant 0 : index
    %241 = vector.load %arg3[%c0_85, %c0_86] : memref<1x128xf32, #tpu.memory_space<vmem>>, vector<1x128xf32>
    tpu.vector_store %arg3[%c0_85, %c0_86], %240 {strides = array<i32>} : memref<1x128xf32, #tpu.memory_space<vmem>>, vector<1x128xf32>,
    return
  }
}

</mosaic_0001>

<llo_original>
// kernel: _fwd.1
$region0: #{_fwd.1}
  #allocation0 [shape = 'u32[]', space=smem, size = 0x4, offset = 0x4, fixed_abs, tag = 'smem constant byte address 0x4 - core index']
  #allocation1 [shape = 'u32[144,128]{1,0:T(1,128)}', space=vmem, size = 0x12000, scoped, tag = 'internal scratch']
  %s0 = inlined_call_operand.vmem [shape: f32[2,40], index: 0, kind: input, shape index: {}]
  %s1 = inlined_call_operand.hbm [shape: bf16[48,384], index: 1, kind: input, shape index: {}]
  %s2 = inlined_call_operand.hbm [shape: bf16[1736,128], index: 2, kind: input, shape index: {}]
  %s3 = inlined_call_operand.vmem [shape: f32[1,128], index: 3, kind: output, shape index: {}]
  %s4 = sld [smem:[#allocation0]]
  $region30: #{_fwd.1} parent=0
    _
  %s6 = ssub.s32 1, %s4
  %s7 = scalar_select 0, %s6, %s4
  $region1: #{_fwd.1} parent=0
    #allocation2 [shape = 'u8[36864]{0}', space=vmem, size = 0x9000, scoped, tag = 'input window, operand 1, single buffered']
    #allocation3 [shape = 's32[1]{0}', space=sflag, size = 0x4, scoped, tag = 'scoped memory for _fwd.1']
    #allocation4 [shape = 'u8[444416]{0}', space=vmem, size = 0x6c800, scoped, tag = 'input window, operand 2, single buffered']
    #allocation5 [shape = 's32[1]{0}', space=sflag, size = 0x4, scoped, tag = 'scoped memory for _fwd.1']
    %8 = vsyncpa [#allocation3], 0
    %9 = vsyncpa [#allocation5], 0
    // Predicated region
    $region2: #{_fwd.1} parent=1 // pred_check
      _
    $region3: #{_fwd.1} parent=1 // pred_check_branch
      %11 = sbr.rel (0) target = $region5
    $region4: #{_fwd.1} parent=1 // pred_region
      _
    $region5: #{_fwd.1} parent=1 // pred_fallthru
      _
    // Predicated region
    $region6: #{_fwd.1} parent=1 // pred_check
      _
    $region7: #{_fwd.1} parent=1 // pred_check_branch
      %13 = sbr.rel (0) target = $region9
    $region8: #{_fwd.1} parent=1 // pred_region
      %s15 = ssub.s32 1152, 1152
      %16 = vsyncadd [#allocation3], %s15
      %s17 = sshll.u32 [#allocation2], 4
      %s18 = int_to_ptr.vmem [resolvable:$true] %s17
      %23 = dma.hbm_to_vmem [thread:$0]  %s1, 1152, %s18, [#allocation3], 192, 192, 12
    $region9: #{_fwd.1} parent=1 // pred_fallthru
      _
    // Predicated region
    $region10: #{_fwd.1} parent=1 // pred_check
      _
    $region11: #{_fwd.1} parent=1 // pred_check_branch
      %25 = sbr.rel (0) target = $region13
    $region12: #{_fwd.1} parent=1 // pred_region
      %s27 = ssub.s32 13888, 13888
      %28 = vsyncadd [#allocation5], %s27
      %s29 = sshll.u32 [#allocation4], 4
      %s30 = int_to_ptr.vmem [resolvable:$true] %s29
      %35 = dma.hbm_to_vmem [thread:$0]  %s2, 13888, %s30, [#allocation5], 64, 64, 4
    $region13: #{_fwd.1} parent=1 // pred_fallthru
      _
    // Predicated region
    $region14: #{_fwd.1} parent=1 // pred_check
      _
    $region15: #{_fwd.1} parent=1 // pred_check_branch
      %37 = sbr.rel (0) target = $region17
    $region16: #{_fwd.1} parent=1 // pred_region
      %38 = dma.done [#allocation3], 1152
    $region17: #{_fwd.1} parent=1 // pred_fallthru
      _
    // Predicated region
    $region18: #{_fwd.1} parent=1 // pred_check
      _
    $region19: #{_fwd.1} parent=1 // pred_check_branch
      %40 = sbr.rel (0) target = $region21
    $region20: #{_fwd.1} parent=1 // pred_region
      %41 = dma.done [#allocation5], 13888
    $region21: #{_fwd.1} parent=1 // pred_fallthru
      _
    %v43 = vld [vmem:[%s0] sm:$0x3]
    %v44 = vld [vmem:[#allocation2] sm:$0xff]
    %v45 = vld [vmem:[#allocation2 + $0x8] sm:$0xf]
    %v46 = vld [vmem:[#allocation2 + $0xc] sm:$0xff]
    %v47 = vld [vmem:[#allocation2 + $0x14] sm:$0xf]
    %v48 = vld [vmem:[#allocation2 + $0x18] sm:$0xff]
    %v49 = vld [vmem:[#allocation2 + $0x20] sm:$0xf]
    %v50 = vld [vmem:[#allocation2 + $0x24] sm:$0xff]
    %v51 = vld [vmem:[#allocation2 + $0x2c] sm:$0xf]
    %v52 = vld [vmem:[#allocation2 + $0x30] sm:$0xff]
    %v53 = vld [vmem:[#allocation2 + $0x38] sm:$0xf]
    %v54 = vld [vmem:[#allocation2 + $0x3c] sm:$0x11]
    %v55 = vld [vmem:[#allocation2 + $0x44] sm:$0x1]
    %v56 = vunpack.c.l.bf16 %v54
    %v57 = vunpack.c.h.bf16 %v54
    %v58 = vunpack.c.l.bf16 %v55
    %v59 = vpack.c.bf16 %v43, %v43
    %v60 = vlaneseq
    %v61 = vshrl.u32 %v60, 7
    %v62 = vsub.s32 0, %v61
    %v63 = vrot.slane %v56, %v62
    %v64 = vlaneseq
    %v65 = vshrl.u32 %v64, 7
    %v66 = vsub.s32 0, %v65
    %v67 = vrot.slane %v57, %v66
    %v68 = vlaneseq
    %v69 = vshrl.u32 %v68, 7
    %v70 = vsub.s32 0, %v69
    %v71 = vrot.slane %v58, %v70
    %v82 = vunpack.c.l.b16 %v44
    %v83 = vunpack.c.h.b16 %v44
    %v84 = vunpack.c.l.b16 %v45
    %v85 = vunpack.c.l.b16 %v46
    %v86 = vunpack.c.h.b16 %v46
    %v87 = vunpack.c.l.b16 %v47
    %v88 = vunpack.c.l.b16 %v48
    %v89 = vunpack.c.h.b16 %v48
    %v90 = vunpack.c.l.b16 %v49
    %v91 = vunpack.c.l.b16 %v50
    %v92 = vunpack.c.h.b16 %v50
    %v93 = vunpack.c.l.b16 %v51
    %v94 = vunpack.c.l.b16 %v52
    %v95 = vunpack.c.h.b16 %v52
    %v96 = vunpack.c.l.b16 %v53
    %v97 = vpack.c.b16 %v85, %v82
    %v98 = vpack.c.b16 %v86, %v83
    %v99 = vpack.c.b16 %v87, %v84
    %v100 = vpack.c.b16 %v91, %v88
    %v101 = vpack.c.b16 %v92, %v89
    %v102 = vpack.c.b16 %v93, %v90
    %v103 = vpack.c.b16 %v94, %v94
    %v104 = vpack.c.b16 %v95, %v95
    %v105 = vpack.c.b16 %v96, %v96
    %vm112 = vcmask 326656
    %v114 = vsel %vm112, %v59, 0
    %vm116 = vcmask 1043456
    %v118 = vsel %vm116, %v103, 0
    %v121 = vsel %vm116, %v104, 0
    %v124 = vsel %vm116, %v105, 0
    %126 = vmatprep.subr.bf16.mxu0 %v98
    %127 = vmatpush1.bf16.msra.mxu0 %v97
    %128 = vmatprep.subr.bf16.mxu0 %v101
    %129 = vmatpush1.bf16.msra.mxu0 %v100
    %130 = vmatprep.subr.bf16.mxu0 %v121
    %131 = vmatpush1.bf16.msra.mxu0 %v118
    %132 = vmatprep.subr.bf16.mxu0 0
    %133 = vmatpush1.bf16.msra.mxu0 0
    %134 = vmatprep.subr.bf16.mxu0 0
    %135 = vmatpush1.bf16.msra.mxu0 0
    %136 = vmatprep.subr.bf16.mxu0 0
    %137 = vmatpush1.bf16.msra.mxu0 0
    %138 = vmatprep.subr.bf16.mxu0 0
    %139 = vmatpush1.bf16.msra.mxu0 0
    %140 = vmatprep.subr.bf16.mxu0 0
    %141 = vmatpush1.bf16.msra.mxu0 0
    %142 = vmatprep.subr.bf16.mxu0 0
    %143 = vmatpush1.bf16.msra.mxu0 0
    %144 = vmatprep.subr.bf16.mxu0 0
    %145 = vmatpush1.bf16.msra.mxu0 0
    %146 = vmatprep.subr.bf16.mxu0 0
    %147 = vmatpush1.bf16.msra.mxu0 0
    %148 = vmatprep.subr.bf16.mxu0 0
    %149 = vmatpush1.bf16.msra.mxu0 0
    %150 = vmatprep.subr.bf16.mxu0 0
    %151 = vmatpush1.bf16.msra.mxu0 0
    %152 = vmatprep.subr.bf16.mxu0 0
    %153 = vmatpush1.bf16.msra.mxu0 0
    %154 = vmatprep.subr.bf16.mxu0 0
    %155 = vmatpush1.bf16.msra.mxu0 0
    %156 = vmatprep.subr.bf16.mxu0 0
    %157 = vmatpush1.bf16.msra.mxu0 0
    %158 = vmatprep.mubr.bf16.mxu0 0
    %159 = vmatmul.mubr.bf16.gmra.mrb[0].mxu0 %v114
    %v160 = vpop.f32.mrb[0].mxu0
    %v161 = vadd.f32 %v63, %v160
    %v162 = vpop.f32.mrb[0].mxu0
    %v163 = vadd.f32 %v67, %v162
    %v164 = vpop.f32.mrb[0].mxu0
    %v165 = vpop.f32.mrb[0].mxu0
    %166 = vdwg.mxu0
    %167 = vmatprep.subr.bf16.mxu0 0
    %168 = vmatpush1.bf16.msra.mxu0 %v99
    %169 = vmatprep.subr.bf16.mxu0 0
    %170 = vmatpush1.bf16.msra.mxu0 %v102
    %171 = vmatprep.subr.bf16.mxu0 0
    %172 = vmatpush1.bf16.msra.mxu0 %v124
    %173 = vmatprep.subr.bf16.mxu0 0
    %174 = vmatpush1.bf16.msra.mxu0 0
    %175 = vmatprep.subr.bf16.mxu0 0
    %176 = vmatpush1.bf16.msra.mxu0 0
    %177 = vmatprep.subr.bf16.mxu0 0
    %178 = vmatpush1.bf16.msra.mxu0 0
    %179 = vmatprep.subr.bf16.mxu0 0
    %180 = vmatpush1.bf16.msra.mxu0 0
    %181 = vmatprep.subr.bf16.mxu0 0
    %182 = vmatpush1.bf16.msra.mxu0 0
    %183 = vmatprep.subr.bf16.mxu0 0
    %184 = vmatpush1.bf16.msra.mxu0 0
    %185 = vmatprep.subr.bf16.mxu0 0
    %186 = vmatpush1.bf16.msra.mxu0 0
    %187 = vmatprep.subr.bf16.mxu0 0
    %188 = vmatpush1.bf16.msra.mxu0 0
    %189 = vmatprep.subr.bf16.mxu0 0
    %190 = vmatpush1.bf16.msra.mxu0 0
    %191 = vmatprep.subr.bf16.mxu0 0
    %192 = vmatpush1.bf16.msra.mxu0 0
    %193 = vmatprep.subr.bf16.mxu0 0
    %194 = vmatpush1.bf16.msra.mxu0 0
    %195 = vmatprep.subr.bf16.mxu0 0
    %196 = vmatpush1.bf16.msra.mxu0 0
    %197 = vmatprep.subr.bf16.mxu0 0
    %198 = vmatpush1.bf16.msra.mxu0 0
    %199 = vmatprep.mubr.bf16.mxu0 0
    %200 = vmatmul.mubr.bf16.gmra.mrb[0].mxu0 %v114
    %v201 = vpop.f32.mrb[0].mxu0
    %v202 = vadd.f32 %v71, %v201
    %v203 = vpop.f32.mrb[0].mxu0
    %v204 = vpop.f32.mrb[0].mxu0
    %v205 = vpop.f32.mrb[0].mxu0
    %206 = vdwg.mxu0
    %vm207 = vcmask 1041408
    %v208 = vsel %vm207, %v161, 0.0
    %209 = vadd.xlane.f32.xlu0 %v208
    %v210 = vpop.xlane.xlu0 %209
    %v211 = vrcp.pop 128.0
    %v212 = vmul.f32 %v210, %v211
    %v213 = vsub.f32 %v161, %v212
    %v214 = vmul.f32 %v213, %v213
    %v215 = vsel %vm207, %v214, 0.0
    %216 = vadd.xlane.f32.xlu0 %v215
    %v217 = vpop.xlane.xlu0 %216
    %v218 = vmul.f32 %v217, %v211
    %v219 = vadd.f32 %v218, 1e-05
    %v220 = vrsqrt.pop %v219
    %v221 = vmul.f32 %v213, %v220
    %v222 = vmul.f32 %v221, 0.5
    %v223 = vmul.f32 %v221, 0.70710677
    %v224 = verf.f32.pop %v223
    %v225 = vadd.f32 %v224, 1.0
    %v226 = vmul.f32 %v222, %v225
    %v227 = vsel %vm207, %v163, 0.0
    %228 = vadd.xlane.f32.xlu0 %v227
    %v229 = vpop.xlane.xlu0 %228
    %v230 = vmul.f32 %v229, %v211
    %v231 = vsub.f32 %v163, %v230
    %v232 = vmul.f32 %v231, %v231
    %v233 = vsel %vm207, %v232, 0.0
    %234 = vadd.xlane.f32.xlu0 %v233
    %v235 = vpop.xlane.xlu0 %234
    %v236 = vmul.f32 %v235, %v211
    %v237 = vadd.f32 %v236, 1e-05
    %v238 = vrsqrt.pop %v237
    %v239 = vmul.f32 %v231, %v238
    %v240 = vmul.f32 %v239, 0.5
    %v241 = vmul.f32 %v239, 0.70710677
    %v242 = verf.f32.pop %v241
    %v243 = vadd.f32 %v242, 1.0
    %v244 = vmul.f32 %v240, %v243
    %v245 = vsel %vm207, %v202, 0.0
    %246 = vadd.xlane.f32.xlu0 %v245
    %v247 = vpop.xlane.xlu0 %246
    %v248 = vmul.f32 %v247, %v211
    %v249 = vsub.f32 %v202, %v248
    %v250 = vmul.f32 %v249, %v249
    %v251 = vsel %vm207, %v250, 0.0
    %252 = vadd.xlane.f32.xlu0 %v251
    %v253 = vpop.xlane.xlu0 %252
    %v254 = vmul.f32 %v253, %v211
    %v255 = vadd.f32 %v254, 1e-05
    %v256 = vrsqrt.pop %v255
    %v257 = vmul.f32 %v249, %v256
    %v258 = vmul.f32 %v257, 0.5
    %v259 = vmul.f32 %v257, 0.70710677
    %v260 = verf.f32.pop %v259
    %v261 = vadd.f32 %v260, 1.0
    %v262 = vmul.f32 %v258, %v261
    %v263 = vpack.c.bf16 %v226, %v226
    %v264 = vpack.c.bf16 %v244, %v244
    %v265 = vpack.c.bf16 %v262, %v262
    %v266 = vld [vmem:[#allocation4] sm:$0xf]
    %v267 = vld [vmem:[#allocation4 + $0x4] sm:$0xf]
    %v268 = vld [vmem:[#allocation4 + $0x8] sm:$0xf]
    %v269 = vld [vmem:[#allocation4 + $0xc] sm:$0xf]
    %v270 = vld [vmem:[#allocation4 + $0x10] sm:$0xf]
    %v271 = vld [vmem:[#allocation4 + $0x14] sm:$0xf]
    %v272 = vld [vmem:[#allocation4 + $0x18] sm:$0xf]
    %v273 = vld [vmem:[#allocation4 + $0x1c] sm:$0xf]
    %v274 = vld [vmem:[#allocation4 + $0x20] sm:$0xf]
    %v275 = vld [vmem:[#allocation4 + $0x24] sm:$0xf]
    %v276 = vld [vmem:[#allocation4 + $0x28] sm:$0xf]
    %v277 = vld [vmem:[#allocation4 + $0x2c] sm:$0xf]
    %v278 = vld [vmem:[#allocation4 + $0x30] sm:$0xf]
    %v279 = vld [vmem:[#allocation4 + $0x34] sm:$0xf]
    %v280 = vld [vmem:[#allocation4 + $0x38] sm:$0xf]
    %v281 = vld [vmem:[#allocation4 + $0x3c] sm:$0xf]
    %v282 = vld [vmem:[#allocation4 + $0x40] sm:$0xf]
    %v283 = vld [vmem:[#allocation4 + $0x44] sm:$0xf]
    %v284 = vld [vmem:[#allocation4 + $0x48] sm:$0xf]
    %v285 = vld [vmem:[#allocation4 + $0x4c] sm:$0xf]
    %v286 = vld [vmem:[#allocation4 + $0x50] sm:$0xf]
    %v287 = vld [vmem:[#allocation4 + $0x54] sm:$0xf]
    %v288 = vld [vmem:[#allocation4 + $0x58] sm:$0xf]
    %v289 = vld [vmem:[#allocation4 + $0x5c] sm:$0xf]
    %v290 = vld [vmem:[#allocation4 + $0x60] sm:$0xf]
    %v291 = vld [vmem:[#allocation4 + $0x64] sm:$0xf]
    %v292 = vld [vmem:[#allocation4 + $0x68] sm:$0xf]
    %v293 = vld [vmem:[#allocation4 + $0x6c] sm:$0xf]
    %v294 = vld [vmem:[#allocation4 + $0x70] sm:$0xf]
    %v295 = vld [vmem:[#allocation4 + $0x74] sm:$0xf]
    %v296 = vld [vmem:[#allocation4 + $0x78] sm:$0xf]
    %v297 = vld [vmem:[#allocation4 + $0x7c] sm:$0xf]
    %v298 = vld [vmem:[#allocation4 + $0x80] sm:$0xf]
    %v299 = vld [vmem:[#allocation4 + $0x84] sm:$0xf]
    %v300 = vld [vmem:[#allocation4 + $0x88] sm:$0xf]
    %v301 = vld [vmem:[#allocation4 + $0x8c] sm:$0xf]
    %v302 = vld [vmem:[#allocation4 + $0x90] sm:$0xf]
    %v303 = vld [vmem:[#allocation4 + $0x94] sm:$0xf]
    %v304 = vld [vmem:[#allocation4 + $0x98] sm:$0xf]
    %v305 = vld [vmem:[#allocation4 + $0x9c] sm:$0xf]
    %v306 = vld [vmem:[#allocation4 + $0xa0] sm:$0xf]
    %v307 = vld [vmem:[#allocation4 + $0xa4] sm:$0xf]
    %v308 = vld [vmem:[#allocation4 + $0xa8] sm:$0xf]
    %v309 = vld [vmem:[#allocation4 + $0xac] sm:$0xf]
    %v310 = vld [vmem:[#allocation4 + $0xb0] sm:$0xf]
    %v311 = vld [vmem:[#allocation4 + $0xb4] sm:$0xf]
    %v312 = vld [vmem:[#allocation4 + $0xb8] sm:$0xf]
    %v313 = vld [vmem:[#allocation4 + $0xbc] sm:$0xf]
    %v314 = vld [vmem:[#allocation4 + $0xc0] sm:$0x1]
    %v315 = vunpack.c.l.bf16 %v314
    %v316 = vlaneseq
    %v317 = vshrl.u32 %v316, 7
    %v318 = vsub.s32 0, %v317
    %v319 = vrot.slane %v315, %v318
    %v368 = vunpack.c.l.b16 %v266
    %v369 = vunpack.c.l.b16 %v267
    %v370 = vunpack.c.l.b16 %v268
    %v371 = vunpack.c.l.b16 %v269
    %v372 = vunpack.c.l.b16 %v270
    %v373 = vunpack.c.l.b16 %v271
    %v374 = vunpack.c.l.b16 %v272
    %v375 = vunpack.c.l.b16 %v273
    %v376 = vunpack.c.l.b16 %v274
    %v377 = vunpack.c.l.b16 %v275
    %v378 = vunpack.c.l.b16 %v276
    %v379 = vunpack.c.l.b16 %v277
    %v380 = vunpack.c.l.b16 %v278
    %v381 = vunpack.c.l.b16 %v279
    %v382 = vunpack.c.l.b16 %v280
    %v383 = vunpack.c.l.b16 %v281
    %v384 = vunpack.c.l.b16 %v282
    %v385 = vunpack.c.l.b16 %v283
    %v386 = vunpack.c.l.b16 %v284
    %v387 = vunpack.c.l.b16 %v285
    %v388 = vunpack.c.l.b16 %v286
    %v389 = vunpack.c.l.b16 %v287
    %v390 = vunpack.c.l.b16 %v288
    %v391 = vunpack.c.l.b16 %v289
    %v392 = vunpack.c.l.b16 %v290
    %v393 = vunpack.c.l.b16 %v291
    %v394 = vunpack.c.l.b16 %v292
    %v395 = vunpack.c.l.b16 %v293
    %v396 = vunpack.c.l.b16 %v294
    %v397 = vunpack.c.l.b16 %v295
    %v398 = vunpack.c.l.b16 %v296
    %v399 = vunpack.c.l.b16 %v297
    %v400 = vunpack.c.l.b16 %v298
    %v401 = vunpack.c.l.b16 %v299
    %v402 = vunpack.c.l.b16 %v300
    %v403 = vunpack.c.l.b16 %v301
    %v404 = vunpack.c.l.b16 %v302
    %v405 = vunpack.c.l.b16 %v303
    %v406 = vunpack.c.l.b16 %v304
    %v407 = vunpack.c.l.b16 %v305
    %v408 = vunpack.c.l.b16 %v306
    %v409 = vunpack.c.l.b16 %v307
    %v410 = vunpack.c.l.b16 %v308
    %v411 = vunpack.c.l.b16 %v309
    %v412 = vunpack.c.l.b16 %v310
    %v413 = vunpack.c.l.b16 %v311
    %v414 = vunpack.c.l.b16 %v312
    %v415 = vunpack.c.l.b16 %v313
    %v416 = vpack.c.b16 %v369, %v368
    %v417 = vpack.c.b16 %v371, %v370
    %v418 = vpack.c.b16 %v373, %v372
    %v419 = vpack.c.b16 %v375, %v374
    %v420 = vpack.c.b16 %v377, %v376
    %v421 = vpack.c.b16 %v379, %v378
    %v422 = vpack.c.b16 %v381, %v380
    %v423 = vpack.c.b16 %v383, %v382
    %v424 = vpack.c.b16 %v385, %v384
    %v425 = vpack.c.b16 %v387, %v386
    %v426 = vpack.c.b16 %v389, %v388
    %v427 = vpack.c.b16 %v391, %v390
    %v428 = vpack.c.b16 %v393, %v392
    %v429 = vpack.c.b16 %v395, %v394
    %v430 = vpack.c.b16 %v397, %v396
    %v431 = vpack.c.b16 %v399, %v398
    %v432 = vpack.c.b16 %v401, %v400
    %v433 = vpack.c.b16 %v403, %v402
    %v434 = vpack.c.b16 %v405, %v404
    %v435 = vpack.c.b16 %v407, %v406
    %v436 = vpack.c.b16 %v409, %v408
    %v437 = vpack.c.b16 %v411, %v410
    %v438 = vpack.c.b16 %v413, %v412
    %v439 = vpack.c.b16 %v415, %v414
    %464 = vmatprep.subr.bf16.mxu0 0
    %465 = vmatpush1.bf16.msra.mxu0 %v416
    %466 = vmatprep.subr.bf16.mxu0 0
    %467 = vmatpush1.bf16.msra.mxu0 %v417
    %468 = vmatprep.subr.bf16.mxu0 0
    %469 = vmatpush1.bf16.msra.mxu0 %v418
    %470 = vmatprep.subr.bf16.mxu0 0
    %471 = vmatpush1.bf16.msra.mxu0 %v419
    %472 = vmatprep.subr.bf16.mxu0 0
    %473 = vmatpush1.bf16.msra.mxu0 %v420
    %474 = vmatprep.subr.bf16.mxu0 0
    %475 = vmatpush1.bf16.msra.mxu0 %v421
    %476 = vmatprep.subr.bf16.mxu0 0
    %477 = vmatpush1.bf16.msra.mxu0 %v422
    %478 = vmatprep.subr.bf16.mxu0 0
    %479 = vmatpush1.bf16.msra.mxu0 %v423
    %480 = vmatprep.subr.bf16.mxu0 0
    %481 = vmatpush1.bf16.msra.mxu0 %v424
    %482 = vmatprep.subr.bf16.mxu0 0
    %483 = vmatpush1.bf16.msra.mxu0 %v425
    %484 = vmatprep.subr.bf16.mxu0 0
    %485 = vmatpush1.bf16.msra.mxu0 %v426
    %486 = vmatprep.subr.bf16.mxu0 0
    %487 = vmatpush1.bf16.msra.mxu0 %v427
    %488 = vmatprep.subr.bf16.mxu0 0
    %489 = vmatpush1.bf16.msra.mxu0 %v428
    %490 = vmatprep.subr.bf16.mxu0 0
    %491 = vmatpush1.bf16.msra.mxu0 %v429
    %492 = vmatprep.subr.bf16.mxu0 0
    %493 = vmatpush1.bf16.msra.mxu0 %v430
    %494 = vmatprep.subr.bf16.mxu0 0
    %495 = vmatpush1.bf16.msra.mxu0 %v431
    %496 = vmatprep.mubr.bf16.mxu0 %v264
    %497 = vmatmul.mubr.bf16.gmra.mrb[0].mxu0 %v263
    %v498 = vpop.f32.mrb[0].mxu0
    %v499 = vadd.f32 %v319, %v498
    %v500 = vpop.f32.mrb[0].mxu0
    %v501 = vpop.f32.mrb[0].mxu0
    %v502 = vpop.f32.mrb[0].mxu0
    %503 = vdwg.mxu0
    %504 = vmatprep.subr.bf16.mxu0 0
    %505 = vmatpush1.bf16.msra.mxu0 %v432
    %506 = vmatprep.subr.bf16.mxu0 0
    %507 = vmatpush1.bf16.msra.mxu0 %v433
    %508 = vmatprep.subr.bf16.mxu0 0
    %509 = vmatpush1.bf16.msra.mxu0 %v434
    %510 = vmatprep.subr.bf16.mxu0 0
    %511 = vmatpush1.bf16.msra.mxu0 %v435
    %512 = vmatprep.subr.bf16.mxu0 0
    %513 = vmatpush1.bf16.msra.mxu0 %v436
    %514 = vmatprep.subr.bf16.mxu0 0
    %515 = vmatpush1.bf16.msra.mxu0 %v437
    %516 = vmatprep.subr.bf16.mxu0 0
    %517 = vmatpush1.bf16.msra.mxu0 %v438
    %518 = vmatprep.subr.bf16.mxu0 0
    %519 = vmatpush1.bf16.msra.mxu0 %v439
    %520 = vmatprep.subr.bf16.mxu0 0
    %521 = vmatpush1.bf16.msra.mxu0 0
    %522 = vmatprep.subr.bf16.mxu0 0
    %523 = vmatpush1.bf16.msra.mxu0 0
    %524 = vmatprep.subr.bf16.mxu0 0
    %525 = vmatpush1.bf16.msra.mxu0 0
    %526 = vmatprep.subr.bf16.mxu0 0
    %527 = vmatpush1.bf16.msra.mxu0 0
    %528 = vmatprep.subr.bf16.mxu0 0
    %529 = vmatpush1.bf16.msra.mxu0 0
    %530 = vmatprep.subr.bf16.mxu0 0
    %531 = vmatpush1.bf16.msra.mxu0 0
    %532 = vmatprep.subr.bf16.mxu0 0
    %533 = vmatpush1.bf16.msra.mxu0 0
    %534 = vmatprep.subr.bf16.mxu0 0
    %535 = vmatpush1.bf16.msra.mxu0 0
    %536 = vmatprep.mubr.bf16.mxu0 0
    %537 = vmatmul.mubr.bf16.gmra.mrb[0].mxu0 %v265
    %v538 = vpop.f32.mrb[0].mxu0
    %v539 = vadd.f32 %v499, %v538
    %v540 = vpop.f32.mrb[0].mxu0
    %v541 = vpop.f32.mrb[0].mxu0
    %v542 = vpop.f32.mrb[0].mxu0
    %543 = vdwg.mxu0
    %v544 = vsel %vm207, %v539, 0.0
    %545 = vadd.xlane.f32.xlu0 %v544
    %v546 = vpop.xlane.xlu0 %545
    %v547 = vmul.f32 %v546, %v211
    %v548 = vsub.f32 %v539, %v547
    %v549 = vmul.f32 %v548, %v548
    %v550 = vsel %vm207, %v549, 0.0
    %551 = vadd.xlane.f32.xlu0 %v550
    %v552 = vpop.xlane.xlu0 %551
    %v553 = vmul.f32 %v552, %v211
    %v554 = vadd.f32 %v553, 1e-05
    %v555 = vrsqrt.pop %v554
    %v556 = vmul.f32 %v548, %v555
    %v557 = vmul.f32 %v556, 0.5
    %v558 = vmul.f32 %v556, 0.70710677
    %v559 = verf.f32.pop %v558
    %v560 = vadd.f32 %v559, 1.0
    %v561 = vmul.f32 %v557, %v560
    %v562 = vld [vmem:[#allocation4 + $0x25c] sm:$0xf]
    %v563 = vld [vmem:[#allocation4 + $0x260] sm:$0xf]
    %v564 = vld [vmem:[#allocation4 + $0x264] sm:$0xf]
    %v565 = vld [vmem:[#allocation4 + $0x268] sm:$0xf]
    %v566 = vld [vmem:[#allocation4 + $0x26c] sm:$0xf]
    %v567 = vld [vmem:[#allocation4 + $0x270] sm:$0xf]
    %v568 = vld [vmem:[#allocation4 + $0x274] sm:$0xf]
    %v569 = vld [vmem:[#allocation4 + $0x278] sm:$0xf]
    %v570 = vld [vmem:[#allocation4 + $0x27c] sm:$0xf]
    %v571 = vld [vmem:[#allocation4 + $0x280] sm:$0xf]
    %v572 = vld [vmem:[#allocation4 + $0x284] sm:$0xf]
    %v573 = vld [vmem:[#allocation4 + $0x288] sm:$0xf]
    %v574 = vld [vmem:[#allocation4 + $0x28c] sm:$0xf]
    %v575 = vld [vmem:[#allocation4 + $0x290] sm:$0xf]
    %v576 = vld [vmem:[#allocation4 + $0x294] sm:$0xf]
    %v577 = vld [vmem:[#allocation4 + $0x298] sm:$0xf]
    %v578 = vpack.c.bf16 %v561, %v561
    %v579 = vld [vmem:[#allocation4 + $0xc4] sm:$0xf]
    %v580 = vld [vmem:[#allocation4 + $0xc8] sm:$0xf]
    %v581 = vld [vmem:[#allocation4 + $0xcc] sm:$0xf]
    %v582 = vld [vmem:[#allocation4 + $0xd0] sm:$0xf]
    %v583 = vld [vmem:[#allocation4 + $0xd4] sm:$0xf]
    %v584 = vld [vmem:[#allocation4 + $0xd8] sm:$0xf]
    %v585 = vld [vmem:[#allocation4 + $0xdc] sm:$0xf]
    %v586 = vld [vmem:[#allocation4 + $0xe0] sm:$0xf]
    %v587 = vld [vmem:[#allocation4 + $0xe4] sm:$0xf]
    %v588 = vld [vmem:[#allocation4 + $0xe8] sm:$0xf]
    %v589 = vld [vmem:[#allocation4 + $0xec] sm:$0xf]
    %v590 = vld [vmem:[#allocation4 + $0xf0] sm:$0xf]
    %v591 = vld [vmem:[#allocation4 + $0xf4] sm:$0xf]
    %v592 = vld [vmem:[#allocation4 + $0xf8] sm:$0xf]
    %v593 = vld [vmem:[#allocation4 + $0xfc] sm:$0xf]
    %v594 = vld [vmem:[#allocation4 + $0x100] sm:$0xf]
    %v595 = vld [vmem:[#allocation4 + $0x104] sm:$0x1]
    %v596 = vunpack.c.l.bf16 %v595
    %v597 = vlaneseq
    %v598 = vshrl.u32 %v597, 7
    %v599 = vsub.s32 0, %v598
    %v600 = vrot.slane %v596, %v599
    %v617 = vunpack.c.l.b16 %v579
    %v618 = vunpack.c.l.b16 %v580
    %v619 = vunpack.c.l.b16 %v581
    %v620 = vunpack.c.l.b16 %v582
    %v621 = vunpack.c.l.b16 %v583
    %v622 = vunpack.c.l.b16 %v584
    %v623 = vunpack.c.l.b16 %v585
    %v624 = vunpack.c.l.b16 %v586
    %v625 = vunpack.c.l.b16 %v587
    %v626 = vunpack.c.l.b16 %v588
    %v627 = vunpack.c.l.b16 %v589
    %v628 = vunpack.c.l.b16 %v590
    %v629 = vunpack.c.l.b16 %v591
    %v630 = vunpack.c.l.b16 %v592
    %v631 = vunpack.c.l.b16 %v593
    %v632 = vunpack.c.l.b16 %v594
    %v633 = vpack.c.b16 %v618, %v617
    %v634 = vpack.c.b16 %v620, %v619
    %v635 = vpack.c.b16 %v622, %v621
    %v636 = vpack.c.b16 %v624, %v623
    %v637 = vpack.c.b16 %v626, %v625
    %v638 = vpack.c.b16 %v628, %v627
    %v639 = vpack.c.b16 %v630, %v629
    %v640 = vpack.c.b16 %v632, %v631
    %649 = vmatprep.subr.bf16.mxu0 0
    %650 = vmatpush1.bf16.msra.mxu0 %v633
    %651 = vmatprep.subr.bf16.mxu0 0
    %652 = vmatpush1.bf16.msra.mxu0 %v634
    %653 = vmatprep.subr.bf16.mxu0 0
    %654 = vmatpush1.bf16.msra.mxu0 %v635
    %655 = vmatprep.subr.bf16.mxu0 0
    %656 = vmatpush1.bf16.msra.mxu0 %v636
    %657 = vmatprep.subr.bf16.mxu0 0
    %658 = vmatpush1.bf16.msra.mxu0 %v637
    %659 = vmatprep.subr.bf16.mxu0 0
    %660 = vmatpush1.bf16.msra.mxu0 %v638
    %661 = vmatprep.subr.bf16.mxu0 0
    %662 = vmatpush1.bf16.msra.mxu0 %v639
    %663 = vmatprep.subr.bf16.mxu0 0
    %664 = vmatpush1.bf16.msra.mxu0 %v640
    %665 = vmatprep.subr.bf16.mxu0 0
    %666 = vmatpush1.bf16.msra.mxu0 0
    %667 = vmatprep.subr.bf16.mxu0 0
    %668 = vmatpush1.bf16.msra.mxu0 0
    %669 = vmatprep.subr.bf16.mxu0 0
    %670 = vmatpush1.bf16.msra.mxu0 0
    %671 = vmatprep.subr.bf16.mxu0 0
    %672 = vmatpush1.bf16.msra.mxu0 0
    %673 = vmatprep.subr.bf16.mxu0 0
    %674 = vmatpush1.bf16.msra.mxu0 0
    %675 = vmatprep.subr.bf16.mxu0 0
    %676 = vmatpush1.bf16.msra.mxu0 0
    %677 = vmatprep.subr.bf16.mxu0 0
    %678 = vmatpush1.bf16.msra.mxu0 0
    %679 = vmatprep.subr.bf16.mxu0 0
    %680 = vmatpush1.bf16.msra.mxu0 0
    %681 = vmatprep.mubr.bf16.mxu0 0
    %682 = vmatmul.mubr.bf16.gmra.mrb[0].mxu0 %v578
    %v683 = vpop.f32.mrb[0].mxu0
    %v684 = vadd.f32 %v600, %v683
    %v685 = vpop.f32.mrb[0].mxu0
    %v686 = vpop.f32.mrb[0].mxu0
    %v687 = vpop.f32.mrb[0].mxu0
    %688 = vdwg.mxu0
    %v689 = vsel %vm207, %v684, -inf
    %690 = vmax.xlane.f32.xlu0 %v689
    %v691 = vpop.xlane.xlu0 %690
    %v692 = vsub.f32 %v684, %v691
    %v693 = vmul.f32 %v692, 1.442695
    %v694 = vpow.pop %v693
    %v695 = vpack.c.bf16 %v694, %v694
    %v712 = vunpack.c.l.b16 %v562
    %v713 = vunpack.c.l.b16 %v563
    %v714 = vunpack.c.l.b16 %v564
    %v715 = vunpack.c.l.b16 %v565
    %v716 = vunpack.c.l.b16 %v566
    %v717 = vunpack.c.l.b16 %v567
    %v718 = vunpack.c.l.b16 %v568
    %v719 = vunpack.c.l.b16 %v569
    %v720 = vunpack.c.l.b16 %v570
    %v721 = vunpack.c.l.b16 %v571
    %v722 = vunpack.c.l.b16 %v572
    %v723 = vunpack.c.l.b16 %v573
    %v724 = vunpack.c.l.b16 %v574
    %v725 = vunpack.c.l.b16 %v575
    %v726 = vunpack.c.l.b16 %v576
    %v727 = vunpack.c.l.b16 %v577
    %v728 = vpack.c.b16 %v713, %v712
    %v729 = vpack.c.b16 %v715, %v714
    %v730 = vpack.c.b16 %v717, %v716
    %v731 = vpack.c.b16 %v719, %v718
    %v732 = vpack.c.b16 %v721, %v720
    %v733 = vpack.c.b16 %v723, %v722
    %v734 = vpack.c.b16 %v725, %v724
    %v735 = vpack.c.b16 %v727, %v726
    %744 = vmatprep.subr.bf16.mxu0 0
    %745 = vmatpush1.bf16.msra.mxu0 %v728
    %746 = vmatprep.subr.bf16.mxu0 0
    %747 = vmatpush1.bf16.msra.mxu0 %v729
    %748 = vmatprep.subr.bf16.mxu0 0
    %749 = vmatpush1.bf16.msra.mxu0 %v730
    %750 = vmatprep.subr.bf16.mxu0 0
    %751 = vmatpush1.bf16.msra.mxu0 %v731
    %752 = vmatprep.subr.bf16.mxu0 0
    %753 = vmatpush1.bf16.msra.mxu0 %v732
    %754 = vmatprep.subr.bf16.mxu0 0
    %755 = vmatpush1.bf16.msra.mxu0 %v733
    %756 = vmatprep.subr.bf16.mxu0 0
    %757 = vmatpush1.bf16.msra.mxu0 %v734
    %758 = vmatprep.subr.bf16.mxu0 0
    %759 = vmatpush1.bf16.msra.mxu0 %v735
    %760 = vmatprep.subr.bf16.mxu0 0
    %761 = vmatpush1.bf16.msra.mxu0 0
    %762 = vmatprep.subr.bf16.mxu0 0
    %763 = vmatpush1.bf16.msra.mxu0 0
    %764 = vmatprep.subr.bf16.mxu0 0
    %765 = vmatpush1.bf16.msra.mxu0 0
    %766 = vmatprep.subr.bf16.mxu0 0
    %767 = vmatpush1.bf16.msra.mxu0 0
    %768 = vmatprep.subr.bf16.mxu0 0
    %769 = vmatpush1.bf16.msra.mxu0 0
    %770 = vmatprep.subr.bf16.mxu0 0
    %771 = vmatpush1.bf16.msra.mxu0 0
    %772 = vmatprep.subr.bf16.mxu0 0
    %773 = vmatpush1.bf16.msra.mxu0 0
    %774 = vmatprep.subr.bf16.mxu0 0
    %775 = vmatpush1.bf16.msra.mxu0 0
    %776 = vmatprep.mubr.bf16.mxu0 0
    %777 = vmatmul.mubr.bf16.gmra.mrb[0].mxu0 %v695
    %v778 = vpop.f32.mrb[0].mxu0
    %v779 = vadd.f32 0.0, %v778
    %v780 = vpop.f32.mrb[0].mxu0
    %v781 = vpop.f32.mrb[0].mxu0
    %v782 = vpop.f32.mrb[0].mxu0
    %783 = vdwg.mxu0
    %v784 = vmax.f32 %v779, 1e-30
    %v785 = vrcp.pop %v784
    %v786 = vmul.f32 %v694, %v785
    %v787 = vpack.c.bf16 %v786, %v786
    %v788 = vld [vmem:[#allocation4 + $0x108] sm:$0xf]
    %v789 = vld [vmem:[#allocation4 + $0x10c] sm:$0xf]
    %v790 = vld [vmem:[#allocation4 + $0x110] sm:$0xf]
    %v791 = vld [vmem:[#allocation4 + $0x114] sm:$0xf]
    %v792 = vld [vmem:[#allocation4 + $0x118] sm:$0xf]
    %v793 = vld [vmem:[#allocation4 + $0x11c] sm:$0xf]
    %v794 = vld [vmem:[#allocation4 + $0x120] sm:$0xf]
    %v795 = vld [vmem:[#allocation4 + $0x124] sm:$0xf]
    %v796 = vld [vmem:[#allocation4 + $0x128] sm:$0xf]
    %v797 = vld [vmem:[#allocation4 + $0x12c] sm:$0xf]
    %v798 = vld [vmem:[#allocation4 + $0x130] sm:$0xf]
    %v799 = vld [vmem:[#allocation4 + $0x134] sm:$0xf]
    %v800 = vld [vmem:[#allocation4 + $0x138] sm:$0xf]
    %v801 = vld [vmem:[#allocation4 + $0x13c] sm:$0xf]
    %v802 = vld [vmem:[#allocation4 + $0x140] sm:$0xf]
    %v803 = vld [vmem:[#allocation4 + $0x144] sm:$0xf]
    %v804 = vld [vmem:[#allocation4 + $0x148] sm:$0x1]
    %v805 = vunpack.c.l.bf16 %v804
    %v806 = vlaneseq
    %v807 = vshrl.u32 %v806, 7
    %v808 = vsub.s32 0, %v807
    %v809 = vrot.slane %v805, %v808
    %v826 = vunpack.c.l.b16 %v788
    %v827 = vunpack.c.l.b16 %v789
    %v828 = vunpack.c.l.b16 %v790
    %v829 = vunpack.c.l.b16 %v791
    %v830 = vunpack.c.l.b16 %v792
    %v831 = vunpack.c.l.b16 %v793
    %v832 = vunpack.c.l.b16 %v794
    %v833 = vunpack.c.l.b16 %v795
    %v834 = vunpack.c.l.b16 %v796
    %v835 = vunpack.c.l.b16 %v797
    %v836 = vunpack.c.l.b16 %v798
    %v837 = vunpack.c.l.b16 %v799
    %v838 = vunpack.c.l.b16 %v800
    %v839 = vunpack.c.l.b16 %v801
    %v840 = vunpack.c.l.b16 %v802
    %v841 = vunpack.c.l.b16 %v803
    %v842 = vpack.c.b16 %v827, %v826
    %v843 = vpack.c.b16 %v829, %v828
    %v844 = vpack.c.b16 %v831, %v830
    %v845 = vpack.c.b16 %v833, %v832
    %v846 = vpack.c.b16 %v835, %v834
    %v847 = vpack.c.b16 %v837, %v836
    %v848 = vpack.c.b16 %v839, %v838
    %v849 = vpack.c.b16 %v841, %v840
    %858 = vmatprep.subr.bf16.mxu0 0
    %859 = vmatpush1.bf16.msra.mxu0 %v842
    %860 = vmatprep.subr.bf16.mxu0 0
    %861 = vmatpush1.bf16.msra.mxu0 %v843
    %862 = vmatprep.subr.bf16.mxu0 0
    %863 = vmatpush1.bf16.msra.mxu0 %v844
    %864 = vmatprep.subr.bf16.mxu0 0
    %865 = vmatpush1.bf16.msra.mxu0 %v845
    %866 = vmatprep.subr.bf16.mxu0 0
    %867 = vmatpush1.bf16.msra.mxu0 %v846
    %868 = vmatprep.subr.bf16.mxu0 0
    %869 = vmatpush1.bf16.msra.mxu0 %v847
    %870 = vmatprep.subr.bf16.mxu0 0
    %871 = vmatpush1.bf16.msra.mxu0 %v848
    %872 = vmatprep.subr.bf16.mxu0 0
    %873 = vmatpush1.bf16.msra.mxu0 %v849
    %874 = vmatprep.subr.bf16.mxu0 0
    %875 = vmatpush1.bf16.msra.mxu0 0
    %876 = vmatprep.subr.bf16.mxu0 0
    %877 = vmatpush1.bf16.msra.mxu0 0
    %878 = vmatprep.subr.bf16.mxu0 0
    %879 = vmatpush1.bf16.msra.mxu0 0
    %880 = vmatprep.subr.bf16.mxu0 0
    %881 = vmatpush1.bf16.msra.mxu0 0
    %882 = vmatprep.subr.bf16.mxu0 0
    %883 = vmatpush1.bf16.msra.mxu0 0
    %884 = vmatprep.subr.bf16.mxu0 0
    %885 = vmatpush1.bf16.msra.mxu0 0
    %886 = vmatprep.subr.bf16.mxu0 0
    %887 = vmatpush1.bf16.msra.mxu0 0
    %888 = vmatprep.subr.bf16.mxu0 0
    %889 = vmatpush1.bf16.msra.mxu0 0
    %890 = vmatprep.mubr.bf16.mxu0 0
    %891 = vmatmul.mubr.bf16.gmra.mrb[0].mxu0 %v787
    %v892 = vpop.f32.mrb[0].mxu0
    %v893 = vadd.f32 %v809, %v892
    %v894 = vpop.f32.mrb[0].mxu0
    %v895 = vpop.f32.mrb[0].mxu0
    %v896 = vpop.f32.mrb[0].mxu0
    %897 = vdwg.mxu0
    %v898 = vpack.c.bf16 %v893, %v893
    %v899 = vld [vmem:[#allocation4 + $0x14c] sm:$0xf]
    %v900 = vld [vmem:[#allocation4 + $0x150] sm:$0xf]
    %v901 = vld [vmem:[#allocation4 + $0x154] sm:$0xf]
    %v902 = vld [vmem:[#allocation4 + $0x158] sm:$0xf]
    %v903 = vld [vmem:[#allocation4 + $0x15c] sm:$0xf]
    %v904 = vld [vmem:[#allocation4 + $0x160] sm:$0xf]
    %v905 = vld [vmem:[#allocation4 + $0x164] sm:$0xf]
    %v906 = vld [vmem:[#allocation4 + $0x168] sm:$0xf]
    %v907 = vld [vmem:[#allocation4 + $0x16c] sm:$0xf]
    %v908 = vld [vmem:[#allocation4 + $0x170] sm:$0xf]
    %v909 = vld [vmem:[#allocation4 + $0x174] sm:$0xf]
    %v910 = vld [vmem:[#allocation4 + $0x178] sm:$0xf]
    %v911 = vld [vmem:[#allocation4 + $0x17c] sm:$0xf]
    %v912 = vld [vmem:[#allocation4 + $0x180] sm:$0xf]
    %v913 = vld [vmem:[#allocation4 + $0x184] sm:$0xf]
    %v914 = vld [vmem:[#allocation4 + $0x188] sm:$0xf]
    %v915 = vld [vmem:[#allocation4 + $0x18c] sm:$0x1]
    %v916 = vunpack.c.l.bf16 %v915
    %v917 = vlaneseq
    %v918 = vshrl.u32 %v917, 7
    %v919 = vsub.s32 0, %v918
    %v920 = vrot.slane %v916, %v919
    %v937 = vunpack.c.l.b16 %v899
    %v938 = vunpack.c.l.b16 %v900
    %v939 = vunpack.c.l.b16 %v901
    %v940 = vunpack.c.l.b16 %v902
    %v941 = vunpack.c.l.b16 %v903
    %v942 = vunpack.c.l.b16 %v904
    %v943 = vunpack.c.l.b16 %v905
    %v944 = vunpack.c.l.b16 %v906
    %v945 = vunpack.c.l.b16 %v907
    %v946 = vunpack.c.l.b16 %v908
    %v947 = vunpack.c.l.b16 %v909
    %v948 = vunpack.c.l.b16 %v910
    %v949 = vunpack.c.l.b16 %v911
    %v950 = vunpack.c.l.b16 %v912
    %v951 = vunpack.c.l.b16 %v913
    %v952 = vunpack.c.l.b16 %v914
    %v953 = vpack.c.b16 %v938, %v937
    %v954 = vpack.c.b16 %v940, %v939
    %v955 = vpack.c.b16 %v942, %v941
    %v956 = vpack.c.b16 %v944, %v943
    %v957 = vpack.c.b16 %v946, %v945
    %v958 = vpack.c.b16 %v948, %v947
    %v959 = vpack.c.b16 %v950, %v949
    %v960 = vpack.c.b16 %v952, %v951
    %969 = vmatprep.subr.bf16.mxu0 0
    %970 = vmatpush1.bf16.msra.mxu0 %v953
    %971 = vmatprep.subr.bf16.mxu0 0
    %972 = vmatpush1.bf16.msra.mxu0 %v954
    %973 = vmatprep.subr.bf16.mxu0 0
    %974 = vmatpush1.bf16.msra.mxu0 %v955
    %975 = vmatprep.subr.bf16.mxu0 0
    %976 = vmatpush1.bf16.msra.mxu0 %v956
    %977 = vmatprep.subr.bf16.mxu0 0
    %978 = vmatpush1.bf16.msra.mxu0 %v957
    %979 = vmatprep.subr.bf16.mxu0 0
    %980 = vmatpush1.bf16.msra.mxu0 %v958
    %981 = vmatprep.subr.bf16.mxu0 0
    %982 = vmatpush1.bf16.msra.mxu0 %v959
    %983 = vmatprep.subr.bf16.mxu0 0
    %984 = vmatpush1.bf16.msra.mxu0 %v960
    %985 = vmatprep.subr.bf16.mxu0 0
    %986 = vmatpush1.bf16.msra.mxu0 0
    %987 = vmatprep.subr.bf16.mxu0 0
    %988 = vmatpush1.bf16.msra.mxu0 0
    %989 = vmatprep.subr.bf16.mxu0 0
    %990 = vmatpush1.bf16.msra.mxu0 0
    %991 = vmatprep.subr.bf16.mxu0 0
    %992 = vmatpush1.bf16.msra.mxu0 0
    %993 = vmatprep.subr.bf16.mxu0 0
    %994 = vmatpush1.bf16.msra.mxu0 0
    %995 = vmatprep.subr.bf16.mxu0 0
    %996 = vmatpush1.bf16.msra.mxu0 0
    %997 = vmatprep.subr.bf16.mxu0 0
    %998 = vmatpush1.bf16.msra.mxu0 0
    %999 = vmatprep.subr.bf16.mxu0 0
    %1000 = vmatpush1.bf16.msra.mxu0 0
    %1001 = vmatprep.mubr.bf16.mxu0 0
    %1002 = vmatmul.mubr.bf16.gmra.mrb[0].mxu0 %v898
    %v1003 = vpop.f32.mrb[0].mxu0
    %v1004 = vadd.f32 %v920, %v1003
    %v1005 = vpop.f32.mrb[0].mxu0
    %v1006 = vpop.f32.mrb[0].mxu0
    %v1007 = vpop.f32.mrb[0].mxu0
    %1008 = vdwg.mxu0
    %v1009 = vsel %vm207, %v1004, -inf
    %1010 = vmax.xlane.f32.xlu0 %v1009
    %v1011 = vpop.xlane.xlu0 %1010
    %v1012 = vsub.f32 %v1004, %v1011
    %v1013 = vmul.f32 %v1012, 1.442695
    %v1014 = vpow.pop %v1013
    %v1015 = vpack.c.bf16 %v1014, %v1014
    %1016 = vmatprep.subr.bf16.mxu0 0
    %1017 = vmatpush1.bf16.msra.mxu0 %v728
    %1018 = vmatprep.subr.bf16.mxu0 0
    %1019 = vmatpush1.bf16.msra.mxu0 %v729
    %1020 = vmatprep.subr.bf16.mxu0 0
    %1021 = vmatpush1.bf16.msra.mxu0 %v730
    %1022 = vmatprep.subr.bf16.mxu0 0
    %1023 = vmatpush1.bf16.msra.mxu0 %v731
    %1024 = vmatprep.subr.bf16.mxu0 0
    %1025 = vmatpush1.bf16.msra.mxu0 %v732
    %1026 = vmatprep.subr.bf16.mxu0 0
    %1027 = vmatpush1.bf16.msra.mxu0 %v733
    %1028 = vmatprep.subr.bf16.mxu0 0
    %1029 = vmatpush1.bf16.msra.mxu0 %v734
    %1030 = vmatprep.subr.bf16.mxu0 0
    %1031 = vmatpush1.bf16.msra.mxu0 %v735
    %1032 = vmatprep.subr.bf16.mxu0 0
    %1033 = vmatpush1.bf16.msra.mxu0 0
    %1034 = vmatprep.subr.bf16.mxu0 0
    %1035 = vmatpush1.bf16.msra.mxu0 0
    %1036 = vmatprep.subr.bf16.mxu0 0
    %1037 = vmatpush1.bf16.msra.mxu0 0
    %1038 = vmatprep.subr.bf16.mxu0 0
    %1039 = vmatpush1.bf16.msra.mxu0 0
    %1040 = vmatprep.subr.bf16.mxu0 0
    %1041 = vmatpush1.bf16.msra.mxu0 0
    %1042 = vmatprep.subr.bf16.mxu0 0
    %1043 = vmatpush1.bf16.msra.mxu0 0
    %1044 = vmatprep.subr.bf16.mxu0 0
    %1045 = vmatpush1.bf16.msra.mxu0 0
    %1046 = vmatprep.subr.bf16.mxu0 0
    %1047 = vmatpush1.bf16.msra.mxu0 0
    %1048 = vmatprep.mubr.bf16.mxu0 0
    %1049 = vmatmul.mubr.bf16.gmra.mrb[0].mxu0 %v1015
    %v1050 = vpop.f32.mrb[0].mxu0
    %v1051 = vadd.f32 0.0, %v1050
    %v1052 = vpop.f32.mrb[0].mxu0
    %v1053 = vpop.f32.mrb[0].mxu0
    %v1054 = vpop.f32.mrb[0].mxu0
    %1055 = vdwg.mxu0
    %v1056 = vmax.f32 %v1051, 1e-30
    %v1057 = vrcp.pop %v1056
    %v1058 = vmul.f32 %v1014, %v1057
    %v1059 = vpack.c.bf16 %v1058, %v1058
    %v1060 = vld [vmem:[#allocation4 + $0x190] sm:$0xf]
    %v1061 = vld [vmem:[#allocation4 + $0x194] sm:$0xf]
    %v1062 = vld [vmem:[#allocation4 + $0x198] sm:$0xf]
    %v1063 = vld [vmem:[#allocation4 + $0x19c] sm:$0xf]
    %v1064 = vld [vmem:[#allocation4 + $0x1a0] sm:$0xf]
    %v1065 = vld [vmem:[#allocation4 + $0x1a4] sm:$0xf]
    %v1066 = vld [vmem:[#allocation4 + $0x1a8] sm:$0xf]
    %v1067 = vld [vmem:[#allocation4 + $0x1ac] sm:$0xf]
    %v1068 = vld [vmem:[#allocation4 + $0x1b0] sm:$0xf]
    %v1069 = vld [vmem:[#allocation4 + $0x1b4] sm:$0xf]
    %v1070 = vld [vmem:[#allocation4 + $0x1b8] sm:$0xf]
    %v1071 = vld [vmem:[#allocation4 + $0x1bc] sm:$0xf]
    %v1072 = vld [vmem:[#allocation4 + $0x1c0] sm:$0xf]
    %v1073 = vld [vmem:[#allocation4 + $0x1c4] sm:$0xf]
    %v1074 = vld [vmem:[#allocation4 + $0x1c8] sm:$0xf]
    %v1075 = vld [vmem:[#allocation4 + $0x1cc] sm:$0xf]
    %v1076 = vld [vmem:[#allocation4 + $0x1d0] sm:$0x1]
    %v1077 = vunpack.c.l.bf16 %v1076
    %v1078 = vlaneseq
    %v1079 = vshrl.u32 %v1078, 7
    %v1080 = vsub.s32 0, %v1079
    %v1081 = vrot.slane %v1077, %v1080
    %v1098 = vunpack.c.l.b16 %v1060
    %v1099 = vunpack.c.l.b16 %v1061
    %v1100 = vunpack.c.l.b16 %v1062
    %v1101 = vunpack.c.l.b16 %v1063
    %v1102 = vunpack.c.l.b16 %v1064
    %v1103 = vunpack.c.l.b16 %v1065
    %v1104 = vunpack.c.l.b16 %v1066
    %v1105 = vunpack.c.l.b16 %v1067
    %v1106 = vunpack.c.l.b16 %v1068
    %v1107 = vunpack.c.l.b16 %v1069
    %v1108 = vunpack.c.l.b16 %v1070
    %v1109 = vunpack.c.l.b16 %v1071
    %v1110 = vunpack.c.l.b16 %v1072
    %v1111 = vunpack.c.l.b16 %v1073
    %v1112 = vunpack.c.l.b16 %v1074
    %v1113 = vunpack.c.l.b16 %v1075
    %v1114 = vpack.c.b16 %v1099, %v1098
    %v1115 = vpack.c.b16 %v1101, %v1100
    %v1116 = vpack.c.b16 %v1103, %v1102
    %v1117 = vpack.c.b16 %v1105, %v1104
    %v1118 = vpack.c.b16 %v1107, %v1106
    %v1119 = vpack.c.b16 %v1109, %v1108
    %v1120 = vpack.c.b16 %v1111, %v1110
    %v1121 = vpack.c.b16 %v1113, %v1112
    %1130 = vmatprep.subr.bf16.mxu0 0
    %1131 = vmatpush1.bf16.msra.mxu0 %v1114
    %1132 = vmatprep.subr.bf16.mxu0 0
    %1133 = vmatpush1.bf16.msra.mxu0 %v1115
    %1134 = vmatprep.subr.bf16.mxu0 0
    %1135 = vmatpush1.bf16.msra.mxu0 %v1116
    %1136 = vmatprep.subr.bf16.mxu0 0
    %1137 = vmatpush1.bf16.msra.mxu0 %v1117
    %1138 = vmatprep.subr.bf16.mxu0 0
    %1139 = vmatpush1.bf16.msra.mxu0 %v1118
    %1140 = vmatprep.subr.bf16.mxu0 0
    %1141 = vmatpush1.bf16.msra.mxu0 %v1119
    %1142 = vmatprep.subr.bf16.mxu0 0
    %1143 = vmatpush1.bf16.msra.mxu0 %v1120
    %1144 = vmatprep.subr.bf16.mxu0 0
    %1145 = vmatpush1.bf16.msra.mxu0 %v1121
    %1146 = vmatprep.subr.bf16.mxu0 0
    %1147 = vmatpush1.bf16.msra.mxu0 0
    %1148 = vmatprep.subr.bf16.mxu0 0
    %1149 = vmatpush1.bf16.msra.mxu0 0
    %1150 = vmatprep.subr.bf16.mxu0 0
    %1151 = vmatpush1.bf16.msra.mxu0 0
    %1152 = vmatprep.subr.bf16.mxu0 0
    %1153 = vmatpush1.bf16.msra.mxu0 0
    %1154 = vmatprep.subr.bf16.mxu0 0
    %1155 = vmatpush1.bf16.msra.mxu0 0
    %1156 = vmatprep.subr.bf16.mxu0 0
    %1157 = vmatpush1.bf16.msra.mxu0 0
    %1158 = vmatprep.subr.bf16.mxu0 0
    %1159 = vmatpush1.bf16.msra.mxu0 0
    %1160 = vmatprep.subr.bf16.mxu0 0
    %1161 = vmatpush1.bf16.msra.mxu0 0
    %1162 = vmatprep.mubr.bf16.mxu0 0
    %1163 = vmatmul.mubr.bf16.gmra.mrb[0].mxu0 %v1059
    %v1164 = vpop.f32.mrb[0].mxu0
    %v1165 = vadd.f32 %v1081, %v1164
    %v1166 = vpop.f32.mrb[0].mxu0
    %v1167 = vpop.f32.mrb[0].mxu0
    %v1168 = vpop.f32.mrb[0].mxu0
    %1169 = vdwg.mxu0
    %v1170 = vpack.c.bf16 %v1165, %v1165
    %v1171 = vld [vmem:[#allocation4 + $0x1d4] sm:$0xf]
    %v1172 = vld [vmem:[#allocation4 + $0x1d8] sm:$0xf]
    %v1173 = vld [vmem:[#allocation4 + $0x1dc] sm:$0xf]
    %v1174 = vld [vmem:[#allocation4 + $0x1e0] sm:$0xf]
    %v1175 = vld [vmem:[#allocation4 + $0x1e4] sm:$0xf]
    %v1176 = vld [vmem:[#allocation4 + $0x1e8] sm:$0xf]
    %v1177 = vld [vmem:[#allocation4 + $0x1ec] sm:$0xf]
    %v1178 = vld [vmem:[#allocation4 + $0x1f0] sm:$0xf]
    %v1179 = vld [vmem:[#allocation4 + $0x1f4] sm:$0xf]
    %v1180 = vld [vmem:[#allocation4 + $0x1f8] sm:$0xf]
    %v1181 = vld [vmem:[#allocation4 + $0x1fc] sm:$0xf]
    %v1182 = vld [vmem:[#allocation4 + $0x200] sm:$0xf]
    %v1183 = vld [vmem:[#allocation4 + $0x204] sm:$0xf]
    %v1184 = vld [vmem:[#allocation4 + $0x208] sm:$0xf]
    %v1185 = vld [vmem:[#allocation4 + $0x20c] sm:$0xf]
    %v1186 = vld [vmem:[#allocation4 + $0x210] sm:$0xf]
    %v1187 = vld [vmem:[#allocation4 + $0x214] sm:$0x1]
    %v1188 = vunpack.c.l.bf16 %v1187
    %v1189 = vlaneseq
    %v1190 = vshrl.u32 %v1189, 7
    %v1191 = vsub.s32 0, %v1190
    %v1192 = vrot.slane %v1188, %v1191
    %v1209 = vunpack.c.l.b16 %v1171
    %v1210 = vunpack.c.l.b16 %v1172
    %v1211 = vunpack.c.l.b16 %v1173
    %v1212 = vunpack.c.l.b16 %v1174
    %v1213 = vunpack.c.l.b16 %v1175
    %v1214 = vunpack.c.l.b16 %v1176
    %v1215 = vunpack.c.l.b16 %v1177
    %v1216 = vunpack.c.l.b16 %v1178
    %v1217 = vunpack.c.l.b16 %v1179
    %v1218 = vunpack.c.l.b16 %v1180
    %v1219 = vunpack.c.l.b16 %v1181
    %v1220 = vunpack.c.l.b16 %v1182
    %v1221 = vunpack.c.l.b16 %v1183
    %v1222 = vunpack.c.l.b16 %v1184
    %v1223 = vunpack.c.l.b16 %v1185
    %v1224 = vunpack.c.l.b16 %v1186
    %v1225 = vpack.c.b16 %v1210, %v1209
    %v1226 = vpack.c.b16 %v1212, %v1211
    %v1227 = vpack.c.b16 %v1214, %v1213
    %v1228 = vpack.c.b16 %v1216, %v1215
    %v1229 = vpack.c.b16 %v1218, %v1217
    %v1230 = vpack.c.b16 %v1220, %v1219
    %v1231 = vpack.c.b16 %v1222, %v1221
    %v1232 = vpack.c.b16 %v1224, %v1223
    %1241 = vmatprep.subr.bf16.mxu0 0
    %1242 = vmatpush1.bf16.msra.mxu0 %v1225
    %1243 = vmatprep.subr.bf16.mxu0 0
    %1244 = vmatpush1.bf16.msra.mxu0 %v1226
    %1245 = vmatprep.subr.bf16.mxu0 0
    %1246 = vmatpush1.bf16.msra.mxu0 %v1227
    %1247 = vmatprep.subr.bf16.mxu0 0
    %1248 = vmatpush1.bf16.msra.mxu0 %v1228
    %1249 = vmatprep.subr.bf16.mxu0 0
    %1250 = vmatpush1.bf16.msra.mxu0 %v1229
    %1251 = vmatprep.subr.bf16.mxu0 0
    %1252 = vmatpush1.bf16.msra.mxu0 %v1230
    %1253 = vmatprep.subr.bf16.mxu0 0
    %1254 = vmatpush1.bf16.msra.mxu0 %v1231
    %1255 = vmatprep.subr.bf16.mxu0 0
    %1256 = vmatpush1.bf16.msra.mxu0 %v1232
    %1257 = vmatprep.subr.bf16.mxu0 0
    %1258 = vmatpush1.bf16.msra.mxu0 0
    %1259 = vmatprep.subr.bf16.mxu0 0
    %1260 = vmatpush1.bf16.msra.mxu0 0
    %1261 = vmatprep.subr.bf16.mxu0 0
    %1262 = vmatpush1.bf16.msra.mxu0 0
    %1263 = vmatprep.subr.bf16.mxu0 0
    %1264 = vmatpush1.bf16.msra.mxu0 0
    %1265 = vmatprep.subr.bf16.mxu0 0
    %1266 = vmatpush1.bf16.msra.mxu0 0
    %1267 = vmatprep.subr.bf16.mxu0 0
    %1268 = vmatpush1.bf16.msra.mxu0 0
    %1269 = vmatprep.subr.bf16.mxu0 0
    %1270 = vmatpush1.bf16.msra.mxu0 0
    %1271 = vmatprep.subr.bf16.mxu0 0
    %1272 = vmatpush1.bf16.msra.mxu0 0
    %1273 = vmatprep.mubr.bf16.mxu0 0
    %1274 = vmatmul.mubr.bf16.gmra.mrb[0].mxu0 %v1170
    %v1275 = vpop.f32.mrb[0].mxu0
    %v1276 = vadd.f32 %v1192, %v1275
    %v1277 = vpop.f32.mrb[0].mxu0
    %v1278 = vpop.f32.mrb[0].mxu0
    %v1279 = vpop.f32.mrb[0].mxu0
    %1280 = vdwg.mxu0
    %v1281 = vsel %vm207, %v1276, -inf
    %1282 = vmax.xlane.f32.xlu0 %v1281
    %v1283 = vpop.xlane.xlu0 %1282
    %v1284 = vsub.f32 %v1276, %v1283
    %v1285 = vmul.f32 %v1284, 1.442695
    %v1286 = vpow.pop %v1285
    %v1287 = vpack.c.bf16 %v1286, %v1286
    %1288 = vmatprep.subr.bf16.mxu0 0
    %1289 = vmatpush1.bf16.msra.mxu0 %v728
    %1290 = vmatprep.subr.bf16.mxu0 0
    %1291 = vmatpush1.bf16.msra.mxu0 %v729
    %1292 = vmatprep.subr.bf16.mxu0 0
    %1293 = vmatpush1.bf16.msra.mxu0 %v730
    %1294 = vmatprep.subr.bf16.mxu0 0
    %1295 = vmatpush1.bf16.msra.mxu0 %v731
    %1296 = vmatprep.subr.bf16.mxu0 0
    %1297 = vmatpush1.bf16.msra.mxu0 %v732
    %1298 = vmatprep.subr.bf16.mxu0 0
    %1299 = vmatpush1.bf16.msra.mxu0 %v733
    %1300 = vmatprep.subr.bf16.mxu0 0
    %1301 = vmatpush1.bf16.msra.mxu0 %v734
    %1302 = vmatprep.subr.bf16.mxu0 0
    %1303 = vmatpush1.bf16.msra.mxu0 %v735
    %1304 = vmatprep.subr.bf16.mxu0 0
    %1305 = vmatpush1.bf16.msra.mxu0 0
    %1306 = vmatprep.subr.bf16.mxu0 0
    %1307 = vmatpush1.bf16.msra.mxu0 0
    %1308 = vmatprep.subr.bf16.mxu0 0
    %1309 = vmatpush1.bf16.msra.mxu0 0
    %1310 = vmatprep.subr.bf16.mxu0 0
    %1311 = vmatpush1.bf16.msra.mxu0 0
    %1312 = vmatprep.subr.bf16.mxu0 0
    %1313 = vmatpush1.bf16.msra.mxu0 0
    %1314 = vmatprep.subr.bf16.mxu0 0
    %1315 = vmatpush1.bf16.msra.mxu0 0
    %1316 = vmatprep.subr.bf16.mxu0 0
    %1317 = vmatpush1.bf16.msra.mxu0 0
    %1318 = vmatprep.subr.bf16.mxu0 0
    %1319 = vmatpush1.bf16.msra.mxu0 0
    %1320 = vmatprep.mubr.bf16.mxu0 0
    %1321 = vmatmul.mubr.bf16.gmra.mrb[0].mxu0 %v1287
    %v1322 = vpop.f32.mrb[0].mxu0
    %v1323 = vadd.f32 0.0, %v1322
    %v1324 = vpop.f32.mrb[0].mxu0
    %v1325 = vpop.f32.mrb[0].mxu0
    %v1326 = vpop.f32.mrb[0].mxu0
    %1327 = vdwg.mxu0
    %v1328 = vmax.f32 %v1323, 1e-30
    %v1329 = vrcp.pop %v1328
    %v1330 = vmul.f32 %v1286, %v1329
    %v1331 = vpack.c.bf16 %v1330, %v1330
    %v1332 = vld [vmem:[#allocation4 + $0x218] sm:$0xf]
    %v1333 = vld [vmem:[#allocation4 + $0x21c] sm:$0xf]
    %v1334 = vld [vmem:[#allocation4 + $0x220] sm:$0xf]
    %v1335 = vld [vmem:[#allocation4 + $0x224] sm:$0xf]
    %v1336 = vld [vmem:[#allocation4 + $0x228] sm:$0xf]
    %v1337 = vld [vmem:[#allocation4 + $0x22c] sm:$0xf]
    %v1338 = vld [vmem:[#allocation4 + $0x230] sm:$0xf]
    %v1339 = vld [vmem:[#allocation4 + $0x234] sm:$0xf]
    %v1340 = vld [vmem:[#allocation4 + $0x238] sm:$0xf]
    %v1341 = vld [vmem:[#allocation4 + $0x23c] sm:$0xf]
    %v1342 = vld [vmem:[#allocation4 + $0x240] sm:$0xf]
    %v1343 = vld [vmem:[#allocation4 + $0x244] sm:$0xf]
    %v1344 = vld [vmem:[#allocation4 + $0x248] sm:$0xf]
    %v1345 = vld [vmem:[#allocation4 + $0x24c] sm:$0xf]
    %v1346 = vld [vmem:[#allocation4 + $0x250] sm:$0xf]
    %v1347 = vld [vmem:[#allocation4 + $0x254] sm:$0xf]
    %v1348 = vld [vmem:[#allocation4 + $0x258] sm:$0x1]
    %v1349 = vunpack.c.l.bf16 %v1348
    %v1350 = vlaneseq
    %v1351 = vshrl.u32 %v1350, 7
    %v1352 = vsub.s32 0, %v1351
    %v1353 = vrot.slane %v1349, %v1352
    %v1370 = vunpack.c.l.b16 %v1332
    %v1371 = vunpack.c.l.b16 %v1333
    %v1372 = vunpack.c.l.b16 %v1334
    %v1373 = vunpack.c.l.b16 %v1335
    %v1374 = vunpack.c.l.b16 %v1336
    %v1375 = vunpack.c.l.b16 %v1337
    %v1376 = vunpack.c.l.b16 %v1338
    %v1377 = vunpack.c.l.b16 %v1339
    %v1378 = vunpack.c.l.b16 %v1340
    %v1379 = vunpack.c.l.b16 %v1341
    %v1380 = vunpack.c.l.b16 %v1342
    %v1381 = vunpack.c.l.b16 %v1343
    %v1382 = vunpack.c.l.b16 %v1344
    %v1383 = vunpack.c.l.b16 %v1345
    %v1384 = vunpack.c.l.b16 %v1346
    %v1385 = vunpack.c.l.b16 %v1347
    %v1386 = vpack.c.b16 %v1371, %v1370
    %v1387 = vpack.c.b16 %v1373, %v1372
    %v1388 = vpack.c.b16 %v1375, %v1374
    %v1389 = vpack.c.b16 %v1377, %v1376
    %v1390 = vpack.c.b16 %v1379, %v1378
    %v1391 = vpack.c.b16 %v1381, %v1380
    %v1392 = vpack.c.b16 %v1383, %v1382
    %v1393 = vpack.c.b16 %v1385, %v1384
    %1402 = vmatprep.subr.bf16.mxu0 0
    %1403 = vmatpush1.bf16.msra.mxu0 %v1386
    %1404 = vmatprep.subr.bf16.mxu0 0
    %1405 = vmatpush1.bf16.msra.mxu0 %v1387
    %1406 = vmatprep.subr.bf16.mxu0 0
    %1407 = vmatpush1.bf16.msra.mxu0 %v1388
    %1408 = vmatprep.subr.bf16.mxu0 0
    %1409 = vmatpush1.bf16.msra.mxu0 %v1389
    %1410 = vmatprep.subr.bf16.mxu0 0
    %1411 = vmatpush1.bf16.msra.mxu0 %v1390
    %1412 = vmatprep.subr.bf16.mxu0 0
    %1413 = vmatpush1.bf16.msra.mxu0 %v1391
    %1414 = vmatprep.subr.bf16.mxu0 0
    %1415 = vmatpush1.bf16.msra.mxu0 %v1392
    %1416 = vmatprep.subr.bf16.mxu0 0
    %1417 = vmatpush1.bf16.msra.mxu0 %v1393
    %1418 = vmatprep.subr.bf16.mxu0 0
    %1419 = vmatpush1.bf16.msra.mxu0 0
    %1420 = vmatprep.subr.bf16.mxu0 0
    %1421 = vmatpush1.bf16.msra.mxu0 0
    %1422 = vmatprep.subr.bf16.mxu0 0
    %1423 = vmatpush1.bf16.msra.mxu0 0
    %1424 = vmatprep.subr.bf16.mxu0 0
    %1425 = vmatpush1.bf16.msra.mxu0 0
    %1426 = vmatprep.subr.bf16.mxu0 0
    %1427 = vmatpush1.bf16.msra.mxu0 0
    %1428 = vmatprep.subr.bf16.mxu0 0
    %1429 = vmatpush1.bf16.msra.mxu0 0
    %1430 = vmatprep.subr.bf16.mxu0 0
    %1431 = vmatpush1.bf16.msra.mxu0 0
    %1432 = vmatprep.subr.bf16.mxu0 0
    %1433 = vmatpush1.bf16.msra.mxu0 0
    %1434 = vmatprep.mubr.bf16.mxu0 0
    %1435 = vmatmul.mubr.bf16.gmra.mrb[0].mxu0 %v1331
    %v1436 = vpop.f32.mrb[0].mxu0
    %v1437 = vadd.f32 %v1353, %v1436
    %v1438 = vpop.f32.mrb[0].mxu0
    %v1439 = vpop.f32.mrb[0].mxu0
    %v1440 = vpop.f32.mrb[0].mxu0
    %1441 = vdwg.mxu0
    %v1442 = vpack.c.bf16 %v1437, %v1437
    %v1443 = vld [vmem:[#allocation4 + $0x29c] sm:$0xf]
    %v1444 = vld [vmem:[#allocation4 + $0x2a0] sm:$0xf]
    %v1445 = vld [vmem:[#allocation4 + $0x2a4] sm:$0xf]
    %v1446 = vld [vmem:[#allocation4 + $0x2a8] sm:$0xf]
    %v1447 = vld [vmem:[#allocation4 + $0x2ac] sm:$0xf]
    %v1448 = vld [vmem:[#allocation4 + $0x2b0] sm:$0xf]
    %v1449 = vld [vmem:[#allocation4 + $0x2b4] sm:$0xf]
    %v1450 = vld [vmem:[#allocation4 + $0x2b8] sm:$0xf]
    %v1451 = vld [vmem:[#allocation4 + $0x2bc] sm:$0xf]
    %v1452 = vld [vmem:[#allocation4 + $0x2c0] sm:$0xf]
    %v1453 = vld [vmem:[#allocation4 + $0x2c4] sm:$0xf]
    %v1454 = vld [vmem:[#allocation4 + $0x2c8] sm:$0xf]
    %v1455 = vld [vmem:[#allocation4 + $0x2cc] sm:$0xf]
    %v1456 = vld [vmem:[#allocation4 + $0x2d0] sm:$0xf]
    %v1457 = vld [vmem:[#allocation4 + $0x2d4] sm:$0xf]
    %v1458 = vld [vmem:[#allocation4 + $0x2d8] sm:$0xf]
    %v1459 = vld [vmem:[#allocation4 + $0x2dc] sm:$0x1]
    %v1460 = vunpack.c.l.bf16 %v1459
    %v1461 = vlaneseq
    %v1462 = vshrl.u32 %v1461, 7
    %v1463 = vsub.s32 0, %v1462
    %v1464 = vrot.slane %v1460, %v1463
    %v1481 = vunpack.c.l.b16 %v1443
    %v1482 = vunpack.c.l.b16 %v1444
    %v1483 = vunpack.c.l.b16 %v1445
    %v1484 = vunpack.c.l.b16 %v1446
    %v1485 = vunpack.c.l.b16 %v1447
    %v1486 = vunpack.c.l.b16 %v1448
    %v1487 = vunpack.c.l.b16 %v1449
    %v1488 = vunpack.c.l.b16 %v1450
    %v1489 = vunpack.c.l.b16 %v1451
    %v1490 = vunpack.c.l.b16 %v1452
    %v1491 = vunpack.c.l.b16 %v1453
    %v1492 = vunpack.c.l.b16 %v1454
    %v1493 = vunpack.c.l.b16 %v1455
    %v1494 = vunpack.c.l.b16 %v1456
    %v1495 = vunpack.c.l.b16 %v1457
    %v1496 = vunpack.c.l.b16 %v1458
    %v1497 = vpack.c.b16 %v1482, %v1481
    %v1498 = vpack.c.b16 %v1484, %v1483
    %v1499 = vpack.c.b16 %v1486, %v1485
    %v1500 = vpack.c.b16 %v1488, %v1487
    %v1501 = vpack.c.b16 %v1490, %v1489
    %v1502 = vpack.c.b16 %v1492, %v1491
    %v1503 = vpack.c.b16 %v1494, %v1493
    %v1504 = vpack.c.b16 %v1496, %v1495
    %1513 = vmatprep.subr.bf16.mxu0 0
    %1514 = vmatpush1.bf16.msra.mxu0 %v1497
    %1515 = vmatprep.subr.bf16.mxu0 0
    %1516 = vmatpush1.bf16.msra.mxu0 %v1498
    %1517 = vmatprep.subr.bf16.mxu0 0
    %1518 = vmatpush1.bf16.msra.mxu0 %v1499
    %1519 = vmatprep.subr.bf16.mxu0 0
    %1520 = vmatpush1.bf16.msra.mxu0 %v1500
    %1521 = vmatprep.subr.bf16.mxu0 0
    %1522 = vmatpush1.bf16.msra.mxu0 %v1501
    %1523 = vmatprep.subr.bf16.mxu0 0
    %1524 = vmatpush1.bf16.msra.mxu0 %v1502
    %1525 = vmatprep.subr.bf16.mxu0 0
    %1526 = vmatpush1.bf16.msra.mxu0 %v1503
    %1527 = vmatprep.subr.bf16.mxu0 0
    %1528 = vmatpush1.bf16.msra.mxu0 %v1504
    %1529 = vmatprep.subr.bf16.mxu0 0
    %1530 = vmatpush1.bf16.msra.mxu0 0
    %1531 = vmatprep.subr.bf16.mxu0 0
    %1532 = vmatpush1.bf16.msra.mxu0 0
    %1533 = vmatprep.subr.bf16.mxu0 0
    %1534 = vmatpush1.bf16.msra.mxu0 0
    %1535 = vmatprep.subr.bf16.mxu0 0
    %1536 = vmatpush1.bf16.msra.mxu0 0
    %1537 = vmatprep.subr.bf16.mxu0 0
    %1538 = vmatpush1.bf16.msra.mxu0 0
    %1539 = vmatprep.subr.bf16.mxu0 0
    %1540 = vmatpush1.bf16.msra.mxu0 0
    %1541 = vmatprep.subr.bf16.mxu0 0
    %1542 = vmatpush1.bf16.msra.mxu0 0
    %1543 = vmatprep.subr.bf16.mxu0 0
    %1544 = vmatpush1.bf16.msra.mxu0 0
    %1545 = vmatprep.mubr.bf16.mxu0 0
    %1546 = vmatmul.mubr.bf16.gmra.mrb[0].mxu0 %v1442
    %v1547 = vpop.f32.mrb[0].mxu0
    %v1548 = vadd.f32 %v1464, %v1547
    %v1549 = vpop.f32.mrb[0].mxu0
    %v1550 = vpop.f32.mrb[0].mxu0
    %v1551 = vpop.f32.mrb[0].mxu0
    %1552 = vdwg.mxu0
    %v1553 = vlaneseq
    %v1554 = vand.u32 %v1553, 127
    %v1555 = vsel %vm207, %v1548, inf
    %1556 = vmin.xlane.f32.xlu0 %v1555
    %v1557 = vpop.xlane.xlu0 %1556
    %vm1558 = vcmp.le.f32.partialorder %v1548, %v1557
    %v1559 = vsel %vm1558, %v1554, 128
    %v1560 = vsel %vm207, %v1559, 2147483647
    %v1561 = vand.u32 %v1560, 65535
    %v1562 = vshra.s32 %v1560, 16
    %v1563 = vcvt.s32.f32 %v1561
    %v1564 = vcvt.s32.f32 %v1562
    %1565 = vmin.xlane.f32.xlu0 %v1564
    %v1566 = vpop.xlane.xlu0 %1565
    %vm1567 = vcmp.eq.f32.partialorder %v1564, %v1566
    %v1568 = vsel %vm1567, %v1563, inf
    %1569 = vmin.xlane.f32.xlu0 %v1568
    %v1570 = vpop.xlane.xlu0 %1569
    %v1571 = vcvt.f32.s32 %v1570
    %v1572 = vcvt.f32.s32 %v1566
    %v1573 = vshll.u32 %v1572, 16
    %v1574 = vadd.s32 %v1573, %v1571
    %vm1575 = vcmp.eq.s32.totalorder %v1554, %v1574
    %v1576 = vsel %vm1575, 1, 0
    %v1577 = vcvt.s32.f32 %v1576
    %v1578 = vpack.c.bf16 %v1577, %v1577
    %v1579 = vld [vmem:[#allocation4 + $0x2e0] sm:$0xf]
    %v1580 = vld [vmem:[#allocation4 + $0x2e4] sm:$0xf]
    %v1581 = vld [vmem:[#allocation4 + $0x2e8] sm:$0xf]
    %v1582 = vld [vmem:[#allocation4 + $0x2ec] sm:$0xf]
    %v1583 = vld [vmem:[#allocation4 + $0x2f0] sm:$0xf]
    %v1584 = vld [vmem:[#allocation4 + $0x2f4] sm:$0xf]
    %v1585 = vld [vmem:[#allocation4 + $0x2f8] sm:$0xf]
    %v1586 = vld [vmem:[#allocation4 + $0x2fc] sm:$0xf]
    %v1587 = vld [vmem:[#allocation4 + $0x300] sm:$0xf]
    %v1588 = vld [vmem:[#allocation4 + $0x304] sm:$0xf]
    %v1589 = vld [vmem:[#allocation4 + $0x308] sm:$0xf]
    %v1590 = vld [vmem:[#allocation4 + $0x30c] sm:$0xf]
    %v1591 = vld [vmem:[#allocation4 + $0x310] sm:$0xf]
    %v1592 = vld [vmem:[#allocation4 + $0x314] sm:$0xf]
    %v1593 = vld [vmem:[#allocation4 + $0x318] sm:$0xf]
    %v1594 = vld [vmem:[#allocation4 + $0x31c] sm:$0xf]
    %v1611 = vunpack.c.l.b16 %v1579
    %v1612 = vunpack.c.l.b16 %v1580
    %v1613 = vunpack.c.l.b16 %v1581
    %v1614 = vunpack.c.l.b16 %v1582
    %v1615 = vunpack.c.l.b16 %v1583
    %v1616 = vunpack.c.l.b16 %v1584
    %v1617 = vunpack.c.l.b16 %v1585
    %v1618 = vunpack.c.l.b16 %v1586
    %v1619 = vunpack.c.l.b16 %v1587
    %v1620 = vunpack.c.l.b16 %v1588
    %v1621 = vunpack.c.l.b16 %v1589
    %v1622 = vunpack.c.l.b16 %v1590
    %v1623 = vunpack.c.l.b16 %v1591
    %v1624 = vunpack.c.l.b16 %v1592
    %v1625 = vunpack.c.l.b16 %v1593
    %v1626 = vunpack.c.l.b16 %v1594
    %v1627 = vpack.c.b16 %v1612, %v1611
    %v1628 = vpack.c.b16 %v1614, %v1613
    %v1629 = vpack.c.b16 %v1616, %v1615
    %v1630 = vpack.c.b16 %v1618, %v1617
    %v1631 = vpack.c.b16 %v1620, %v1619
    %v1632 = vpack.c.b16 %v1622, %v1621
    %v1633 = vpack.c.b16 %v1624, %v1623
    %v1634 = vpack.c.b16 %v1626, %v1625
    %1643 = vmatprep.subr.bf16.mxu0 0
    %1644 = vmatpush1.bf16.msra.mxu0 %v1627
    %1645 = vmatprep.subr.bf16.mxu0 0
    %1646 = vmatpush1.bf16.msra.mxu0 %v1628
    %1647 = vmatprep.subr.bf16.mxu0 0
    %1648 = vmatpush1.bf16.msra.mxu0 %v1629
    %1649 = vmatprep.subr.bf16.mxu0 0
    %1650 = vmatpush1.bf16.msra.mxu0 %v1630
    %1651 = vmatprep.subr.bf16.mxu0 0
    %1652 = vmatpush1.bf16.msra.mxu0 %v1631
    %1653 = vmatprep.subr.bf16.mxu0 0
    %1654 = vmatpush1.bf16.msra.mxu0 %v1632
    %1655 = vmatprep.subr.bf16.mxu0 0
    %1656 = vmatpush1.bf16.msra.mxu0 %v1633
    %1657 = vmatprep.subr.bf16.mxu0 0
    %1658 = vmatpush1.bf16.msra.mxu0 %v1634
    %1659 = vmatprep.subr.bf16.mxu0 0
    %1660 = vmatpush1.bf16.msra.mxu0 0
    %1661 = vmatprep.subr.bf16.mxu0 0
    %1662 = vmatpush1.bf16.msra.mxu0 0
    %1663 = vmatprep.subr.bf16.mxu0 0
    %1664 = vmatpush1.bf16.msra.mxu0 0
    %1665 = vmatprep.subr.bf16.mxu0 0
    %1666 = vmatpush1.bf16.msra.mxu0 0
    %1667 = vmatprep.subr.bf16.mxu0 0
    %1668 = vmatpush1.bf16.msra.mxu0 0
    %1669 = vmatprep.subr.bf16.mxu0 0
    %1670 = vmatpush1.bf16.msra.mxu0 0
    %1671 = vmatprep.subr.bf16.mxu0 0
    %1672 = vmatpush1.bf16.msra.mxu0 0
    %1673 = vmatprep.subr.bf16.mxu0 0
    %1674 = vmatpush1.bf16.msra.mxu0 0
    %1675 = vmatprep.mubr.bf16.mxu0 0
    %1676 = vmatmul.mubr.bf16.gmra.mrb[0].mxu0 %v1578
    %v1677 = vpop.f32.mrb[0].mxu0
    %v1678 = vadd.f32 0.0, %v1677
    %v1679 = vpop.f32.mrb[0].mxu0
    %v1680 = vpop.f32.mrb[0].mxu0
    %v1681 = vpop.f32.mrb[0].mxu0
    %1682 = vdwg.mxu0
    %v1683 = vsel %vm207, %v1678, 0.0
    %v1684 = vrot.slane %v1683, 4
    %v1685 = vadd.f32 %v1683, %v1684
    %v1686 = vrot.slane %v1685, 2
    %v1687 = vadd.f32 %v1685, %v1686
    %v1688 = vrot.slane %v1687, 1
    %v1689 = vadd.f32 %v1687, %v1688
    %v1690 = vrcp.pop 2.0
    %v1691 = vmul.f32 %v1689, %v1690
    %v1692 = vpack.c.bf16 %v1691, %v1691
    %v1693 = vld [vmem:[#allocation4 + $0x320] sm:$0xf]
    %v1694 = vld [vmem:[#allocation4 + $0x324] sm:$0xf]
    %v1695 = vld [vmem:[#allocation4 + $0x328] sm:$0xf]
    %v1696 = vld [vmem:[#allocation4 + $0x32c] sm:$0xf]
    %v1697 = vld [vmem:[#allocation4 + $0x330] sm:$0xf]
    %v1698 = vld [vmem:[#allocation4 + $0x334] sm:$0xf]
    %v1699 = vld [vmem:[#allocation4 + $0x338] sm:$0xf]
    %v1700 = vld [vmem:[#allocation4 + $0x33c] sm:$0xf]
    %v1701 = vld [vmem:[#allocation4 + $0x340] sm:$0xf]
    %v1702 = vld [vmem:[#allocation4 + $0x344] sm:$0xf]
    %v1703 = vld [vmem:[#allocation4 + $0x348] sm:$0xf]
    %v1704 = vld [vmem:[#allocation4 + $0x34c] sm:$0xf]
    %v1705 = vld [vmem:[#allocation4 + $0x350] sm:$0xf]
    %v1706 = vld [vmem:[#allocation4 + $0x354] sm:$0xf]
    %v1707 = vld [vmem:[#allocation4 + $0x358] sm:$0xf]
    %v1708 = vld [vmem:[#allocation4 + $0x35c] sm:$0xf]
    %v1709 = vld [vmem:[#allocation4 + $0x360] sm:$0x1]
    %v1710 = vunpack.c.l.bf16 %v1709
    %v1727 = vunpack.c.l.b16 %v1693
    %v1728 = vunpack.c.l.b16 %v1694
    %v1729 = vunpack.c.l.b16 %v1695
    %v1730 = vunpack.c.l.b16 %v1696
    %v1731 = vunpack.c.l.b16 %v1697
    %v1732 = vunpack.c.l.b16 %v1698
    %v1733 = vunpack.c.l.b16 %v1699
    %v1734 = vunpack.c.l.b16 %v1700
    %v1735 = vunpack.c.l.b16 %v1701
    %v1736 = vunpack.c.l.b16 %v1702
    %v1737 = vunpack.c.l.b16 %v1703
    %v1738 = vunpack.c.l.b16 %v1704
    %v1739 = vunpack.c.l.b16 %v1705
    %v1740 = vunpack.c.l.b16 %v1706
    %v1741 = vunpack.c.l.b16 %v1707
    %v1742 = vunpack.c.l.b16 %v1708
    %v1743 = vpack.c.b16 %v1728, %v1727
    %v1744 = vpack.c.b16 %v1730, %v1729
    %v1745 = vpack.c.b16 %v1732, %v1731
    %v1746 = vpack.c.b16 %v1734, %v1733
    %v1747 = vpack.c.b16 %v1736, %v1735
    %v1748 = vpack.c.b16 %v1738, %v1737
    %v1749 = vpack.c.b16 %v1740, %v1739
    %v1750 = vpack.c.b16 %v1742, %v1741
    %1759 = vmatprep.subr.bf16.mxu0 0
    %1760 = vmatpush1.bf16.msra.mxu0 %v1743
    %1761 = vmatprep.subr.bf16.mxu0 0
    %1762 = vmatpush1.bf16.msra.mxu0 %v1744
    %1763 = vmatprep.subr.bf16.mxu0 0
    %1764 = vmatpush1.bf16.msra.mxu0 %v1745
    %1765 = vmatprep.subr.bf16.mxu0 0
    %1766 = vmatpush1.bf16.msra.mxu0 %v1746
    %1767 = vmatprep.subr.bf16.mxu0 0
    %1768 = vmatpush1.bf16.msra.mxu0 %v1747
    %1769 = vmatprep.subr.bf16.mxu0 0
    %1770 = vmatpush1.bf16.msra.mxu0 %v1748
    %1771 = vmatprep.subr.bf16.mxu0 0
    %1772 = vmatpush1.bf16.msra.mxu0 %v1749
    %1773 = vmatprep.subr.bf16.mxu0 0
    %1774 = vmatpush1.bf16.msra.mxu0 %v1750
    %1775 = vmatprep.subr.bf16.mxu0 0
    %1776 = vmatpush1.bf16.msra.mxu0 0
    %1777 = vmatprep.subr.bf16.mxu0 0
    %1778 = vmatpush1.bf16.msra.mxu0 0
    %1779 = vmatprep.subr.bf16.mxu0 0
    %1780 = vmatpush1.bf16.msra.mxu0 0
    %1781 = vmatprep.subr.bf16.mxu0 0
    %1782 = vmatpush1.bf16.msra.mxu0 0
    %1783 = vmatprep.subr.bf16.mxu0 0
    %1784 = vmatpush1.bf16.msra.mxu0 0
    %1785 = vmatprep.subr.bf16.mxu0 0
    %1786 = vmatpush1.bf16.msra.mxu0 0
    %1787 = vmatprep.subr.bf16.mxu0 0
    %1788 = vmatpush1.bf16.msra.mxu0 0
    %1789 = vmatprep.subr.bf16.mxu0 0
    %1790 = vmatpush1.bf16.msra.mxu0 0
    %1791 = vmatprep.mubr.bf16.mxu0 0
    %1792 = vmatmul.mubr.bf16.gmra.mrb[0].mxu0 %v1692
    %v1793 = vpop.f32.mrb[0].mxu0
    %v1794 = vadd.f32 %v1710, %v1793
    %v1795 = vpop.f32.mrb[0].mxu0
    %v1796 = vpop.f32.mrb[0].mxu0
    %v1797 = vpop.f32.mrb[0].mxu0
    %1798 = vdwg.mxu0
    %v1799 = vmax.f32 %v1794, 0.0
    %v1800 = vsub.f32 0.0, %v1794
    %v1801 = vmul.f32 %v1800, 1.442695
    %v1802 = vpow.pop %v1801
    %v1803 = vadd.f32 %v1802, 1.0
    %v1804 = vrcp.pop %v1803
    %v1805 = vmul.f32 1.0, %v1804
    %vm1806 = vcmp.eq.s32.totalorder %v1554, 1
    %v1807 = vsel %vm1806, %v1799, %v1805
    %vm1808 = vcmp.lt.s32.totalorder %v1554, 6
    %v1809 = vsel %vm1808, %v1807, 0.0
    %1810 = vst [vmem:[%s3] sm:$0x1] %v1809
    // Predicated region
    $region22: #{_fwd.1} parent=1 // pred_check
      _
    $region23: #{_fwd.1} parent=1 // pred_check_branch
      %1812 = sbr.rel (0) target = $region25
    $region24: #{_fwd.1} parent=1 // pred_region
      _
    $region25: #{_fwd.1} parent=1 // pred_fallthru
      _
    // Predicated region
    $region26: #{_fwd.1} parent=1 // pred_check
      _
    $region27: #{_fwd.1} parent=1 // pred_check_branch
      %1814 = sbr.rel (0) target = $region29
    $region28: #{_fwd.1} parent=1 // pred_region
      _
    $region29: #{_fwd.1} parent=1 // pred_fallthru
      _
    %1815 = vsyncpa [#allocation3], 1
    %1816 = vsyncpa [#allocation5], 1

</llo_original>
